<compile_context>
chip_gen: v5e
topology: v5e:2x2
jax: 0.10.0
libtpu: 0.0.40
codegen_flags: <defaults>
</compile_context>

<pallas_src>
import jax
import jax.numpy as jnp
from jax import lax
from jax.experimental import pallas as pl
from jax.experimental.pallas import tpu as pltpu

# Small stand-in sizes (module default num_hidden=2048; we use 128 so the
# hidden dim maps exactly onto the 128-lane vreg axis).
H = 128          # num_hidden
IN_DIM = 2       # Linear1_Net first layer takes concat([x_i, y_j]) of dim 2


def _critic_kernel(x_ref, y_ref,
                   w1_ref, b1_ref, w2_ref, b2_ref, w3_ref, b3_ref,
                   w4_ref, b4_ref, w5_ref, b5_ref,
                   prob_ref, logit_ref):
    tm = x_ref.shape[0]               # x rows handled by this grid step (static)

    # Hoisted, x-row independent pieces.
    # Layer-1 contribution of y and the bias:  y[c]*w1[1,:] + b1  -> (tn, H)
    yw = y_ref[...] * w1_ref[1:2, :] + b1_ref[...]
    w1x = w1_ref[0:1, :]                               # (1, H)
    w2 = w2_ref[...]; b2 = b2_ref[...]                 # bf16 weights, f32 bias
    w3 = w3_ref[...]; b3 = b3_ref[...]
    w4 = w4_ref[...]; b4 = b4_ref[...]
    w5 = w5_ref[...]; b5 = b5_ref[...]                 # (1, H), (1, 1) f32

    for r in range(tm):                                # small static unroll
        xr = x_ref[r:r + 1, :]                         # (1, 1)
        # Linear(2, H) + ReLU — pure VPU (no K=2 MXU pass).
        h = jnp.maximum(xr * w1x + yw, 0.0)            # (tn, H) f32
        # Three Linear(H, H) + ReLU on the MXU, bf16 in / f32 accumulate.
        h = jnp.maximum(
            jnp.dot(h.astype(jnp.bfloat16), w2,
                    preferred_element_type=jnp.float32) + b2, 0.0)
        h = jnp.maximum(
            jnp.dot(h.astype(jnp.bfloat16), w3,
                    preferred_element_type=jnp.float32) + b3, 0.0)
        h = jnp.maximum(
            jnp.dot(h.astype(jnp.bfloat16), w4,
                    preferred_element_type=jnp.float32) + b4, 0.0)
        # Linear(H, 1): contract H (lane axis) of h against the w5 row with a
        # trans_b dot so the logits land lane-dense as (1, tn).
        logit = lax.dot_general(
            w5, h, (((1,), (1,)), ((), ())),
            preferred_element_type=jnp.float32) + b5   # (1, tn)
        logit_ref[r:r + 1, :] = logit
        # sigmoid via EUP exp + approx reciprocal (EUP slot, ~free).
        prob_ref[r:r + 1, :] = pl.reciprocal(1.0 + jnp.exp(-logit), approx=True)


def _pick_tiles(B):
    # Block shapes must be multiples of (8, 128) on the last two dims or equal
    # to the full array extent; fall back to full-B tiles when B is "odd".
    tm = 8 if B % 8 == 0 else B
    tn = min(B, 1024) if B % 128 == 0 else B
    return tm, tn


def concat_critic1_forward(x, y, params, tm=None, tn=None, vmem_limit_bytes=None):
    """Pallas equivalent of ConcatCritic1.forward(x, y) -> (prob, logit), both (B, B)."""
    B = x.shape[0]
    (w1, b1, w2, b2, w3, b3, w4, b4, w5, b5) = params
    hidden = w1.shape[1]

    auto_tm, auto_tn = _pick_tiles(B)
    tm = auto_tm if tm is None else tm
    tn = auto_tn if tn is None else tn
    assert B % tm == 0 and B % tn == 0

    # bf16 weights for the MXU layers (halves VMEM, doubles MXU throughput);
    # biases and the first/last layers stay f32.
    w2b = w2.astype(jnp.bfloat16)
    w3b = w3.astype(jnp.bfloat16)
    w4b = w4.astype(jnp.bfloat16)
    w5_row = w5.reshape(1, hidden)                     # (1, H) row for the trans_b dot

    full = lambda i, j: (0, 0)
    in_specs = [
        pl.BlockSpec((tm, 1), lambda i, j: (i, 0)),    # x rows for this block
        pl.BlockSpec((tn, 1), lambda i, j: (j, 0)),    # y cols for this block
        pl.BlockSpec(w1.shape, full),                  # (2, H)
        pl.BlockSpec(b1.shape, full),                  # (1, H)
        pl.BlockSpec(w2b.shape, full),                 # (H, H) bf16
        pl.BlockSpec(b2.shape, full),
        pl.BlockSpec(w3b.shape, full),
        pl.BlockSpec(b3.shape, full),
        pl.BlockSpec(w4b.shape, full),
        pl.BlockSpec(b4.shape, full),
        pl.BlockSpec((1, hidden), full),               # w5 as a row
        pl.BlockSpec(b5.shape, full),                  # (1, 1)
    ]
    out_specs = [pl.BlockSpec((tm, tn), lambda i, j: (i, j)),
                 pl.BlockSpec((tm, tn), lambda i, j: (i, j))]

    prob, logit = pl.pallas_call(
        _critic_kernel,
        out_shape=(jax.ShapeDtypeStruct((B, B), jnp.float32),
                   jax.ShapeDtypeStruct((B, B), jnp.float32)),
        grid_spec=pltpu.PrefetchScalarGridSpec(
            num_scalar_prefetch=0,
            grid=(B // tm, B // tn),
            in_specs=in_specs,
            out_specs=out_specs,
        ),
        compiler_params=pltpu.CompilerParams(
            dimension_semantics=("parallel", "parallel"),
            vmem_limit_bytes=vmem_limit_bytes),
    )(x, y, w1, b1, w2b, b2, w3b, b3, w4b, b4, w5_row, b5)
    return prob, logit


def init_params(key, hidden=H, in_dim=IN_DIM):
    """Deterministic init of Linear1_Net params (stored as [in, out] for matmul)."""
    dims = [(in_dim, hidden), (hidden, hidden), (hidden, hidden),
            (hidden, hidden), (hidden, 1)]
    params = []
    for (din, dout) in dims:
        key, kw, kb = jax.random.split(key, 3)
        bound = 1.0 / jnp.sqrt(din)
        w = jax.random.uniform(kw, (din, dout), jnp.float32, -bound, bound)
        b = jax.random.uniform(kb, (1, dout), jnp.float32, -bound, bound)
        params += [w, b]
    return tuple(params)


def _reference_forward(x, y, params):
    """Pure-JAX reference of the same forward pass (post-transpose orientation),
    using the same bf16-in / f32-accumulate convention for the H x H layers."""
    B = x.shape[0]
    (w1, b1, w2, b2, w3, b3, w4, b4, w5, b5) = params
    # out[i, j] = f(concat(x[i], y[j]))  — identical to the module's returned .t().
    x_t = jnp.broadcast_to(x[:, None, :], (B, B, x.shape[1]))
    y_t = jnp.broadcast_to(y[None, :, :], (B, B, y.shape[1]))
    h = jnp.concatenate([x_t, y_t], axis=2).reshape(B * B, -1)
    h = jnp.maximum(h @ w1 + b1, 0.0)
    for (w, b) in ((w2, b2), (w3, b3), (w4, b4)):
        h = jnp.maximum(
            jnp.dot(h.astype(jnp.bfloat16), w.astype(jnp.bfloat16),
                    preferred_element_type=jnp.float32) + b, 0.0)
    logit = h @ w5 + b5
    prob = 1.0 / (1.0 + jnp.exp(-logit))
    return prob.reshape(B, B), logit.reshape(B, B)


if __name__ == "__main__":
    key = jax.random.PRNGKey(0)
    k_x, k_y, k_p = jax.random.split(key, 3)

    B = 8                       # small batch -> B*B = 64 pairs
    x = jax.random.normal(k_x, (B, 1), jnp.float32)
    y = jax.random.normal(k_y, (B, 1), jnp.float32)
    params = init_params(k_p)

    prob, logit = jax.jit(concat_critic1_forward)(x, y, params)
    jax.block_until_ready((prob, logit))

    prob_ref, logit_ref = _reference_forward(x, y, params)
    assert prob.shape == (B, B) and logit.shape == (B, B)
    assert jnp.allclose(logit, logit_ref, rtol=2e-2, atol=2e-2), \
        float(jnp.max(jnp.abs(logit - logit_ref)))
    assert jnp.allclose(prob, prob_ref, rtol=2e-2, atol=2e-2), \
        float(jnp.max(jnp.abs(prob - prob_ref)))

    print("KERNEL_OK")
</pallas_src>

<mosaic_0001>
module attributes {stable_mosaic.version = 11 : i64} {
  func.func @_critic_kernel(%arg0: i32, %arg1: i32, %arg2: memref<8x1xf32, #tpu.memory_space<vmem>>, %arg3: memref<8x1xf32, #tpu.memory_space<vmem>>, %arg4: memref<2x128xf32, #tpu.memory_space<vmem>>, %arg5: memref<1x128xf32, #tpu.memory_space<vmem>>, %arg6: memref<128x128xbf16, #tpu.memory_space<vmem>>, %arg7: memref<1x128xf32, #tpu.memory_space<vmem>>, %arg8: memref<128x128xbf16, #tpu.memory_space<vmem>>, %arg9: memref<1x128xf32, #tpu.memory_space<vmem>>, %arg10: memref<128x128xbf16, #tpu.memory_space<vmem>>, %arg11: memref<1x128xf32, #tpu.memory_space<vmem>>, %arg12: memref<1x128xf32, #tpu.memory_space<vmem>>, %arg13: memref<1x1xf32, #tpu.memory_space<vmem>>, %arg14: memref<8x8xf32, #tpu.memory_space<vmem>>, %arg15: memref<8x8xf32, #tpu.memory_space<vmem>>) attributes {dimension_semantics = [#tpu.dimension_semantics<parallel>, #tpu.dimension_semantics<parallel>], iteration_bounds = array<i64: 1, 1>, scalar_prefetch = 0 : i64, scratch_operands = 0 : i64, tpu.core_type = #tpu.core_type<tc>, window_params = [{transform_indices = @transform_0, window_bounds = array<i64: 8, 1>}, {transform_indices = @transform_1, window_bounds = array<i64: 8, 1>}, {pipeline_mode = #tpu.pipeline_mode<synchronous>, transform_indices = @transform_2, window_bounds = array<i64: 2, 128>}, {pipeline_mode = #tpu.pipeline_mode<synchronous>, transform_indices = @transform_3, window_bounds = array<i64: 1, 128>}, {pipeline_mode = #tpu.pipeline_mode<synchronous>, transform_indices = @transform_4, window_bounds = array<i64: 128, 128>}, {pipeline_mode = #tpu.pipeline_mode<synchronous>, transform_indices = @transform_5, window_bounds = array<i64: 1, 128>}, {pipeline_mode = #tpu.pipeline_mode<synchronous>, transform_indices = @transform_6, window_bounds = array<i64: 128, 128>}, {pipeline_mode = #tpu.pipeline_mode<synchronous>, transform_indices = @transform_7, window_bounds = array<i64: 1, 128>}, {pipeline_mode = #tpu.pipeline_mode<synchronous>, transform_indices = @transform_8, window_bounds = array<i64: 128, 128>}, {pipeline_mode = #tpu.pipeline_mode<synchronous>, transform_indices = @transform_9, window_bounds = array<i64: 1, 128>}, {pipeline_mode = #tpu.pipeline_mode<synchronous>, transform_indices = @transform_10, window_bounds = array<i64: 1, 128>}, {pipeline_mode = #tpu.pipeline_mode<synchronous>, transform_indices = @transform_11, window_bounds = array<i64: 1, 1>}, {transform_indices = @transform_12, window_bounds = array<i64: 8, 8>}, {transform_indices = @transform_13, window_bounds = array<i64: 8, 8>}]} {
    %c0 = arith.constant 0 : index
    %c0_0 = arith.constant 0 : index
    %0 = vector.load %arg3[%c0, %c0_0] : memref<8x1xf32, #tpu.memory_space<vmem>>, vector<8x1xf32>
    %c1 = arith.constant 1 : index
    %c0_1 = arith.constant 0 : index
    %1 = vector.load %arg4[%c1, %c0_1] : memref<2x128xf32, #tpu.memory_space<vmem>>, vector<1x128xf32>
    %2 = vector.broadcast %0 : vector<8x1xf32> to vector<8x128xf32>
    %3 = vector.broadcast %1 : vector<1x128xf32> to vector<8x128xf32>
    %4 = arith.mulf %2, %3 : vector<8x128xf32>
    %c0_2 = arith.constant 0 : index
    %c0_3 = arith.constant 0 : index
    %5 = vector.load %arg5[%c0_2, %c0_3] : memref<1x128xf32, #tpu.memory_space<vmem>>, vector<1x128xf32>
    %6 = vector.broadcast %5 : vector<1x128xf32> to vector<8x128xf32>
    %7 = arith.addf %4, %6 : vector<8x128xf32>
    %c0_4 = arith.constant 0 : index
    %c0_5 = arith.constant 0 : index
    %8 = vector.load %arg4[%c0_4, %c0_5] : memref<2x128xf32, #tpu.memory_space<vmem>>, vector<1x128xf32>
    %c0_6 = arith.constant 0 : index
    %c0_7 = arith.constant 0 : index
    %9 = vector.load %arg6[%c0_6, %c0_7] : memref<128x128xbf16, #tpu.memory_space<vmem>>, vector<128x128xbf16>
    %c0_8 = arith.constant 0 : index
    %c0_9 = arith.constant 0 : index
    %10 = vector.load %arg7[%c0_8, %c0_9] : memref<1x128xf32, #tpu.memory_space<vmem>>, vector<1x128xf32>
    %c0_10 = arith.constant 0 : index
    %c0_11 = arith.constant 0 : index
    %11 = vector.load %arg8[%c0_10, %c0_11] : memref<128x128xbf16, #tpu.memory_space<vmem>>, vector<128x128xbf16>
    %c0_12 = arith.constant 0 : index
    %c0_13 = arith.constant 0 : index
    %12 = vector.load %arg9[%c0_12, %c0_13] : memref<1x128xf32, #tpu.memory_space<vmem>>, vector<1x128xf32>
    %c0_14 = arith.constant 0 : index
    %c0_15 = arith.constant 0 : index
    %13 = vector.load %arg10[%c0_14, %c0_15] : memref<128x128xbf16, #tpu.memory_space<vmem>>, vector<128x128xbf16>
    %c0_16 = arith.constant 0 : index
    %c0_17 = arith.constant 0 : index
    %14 = vector.load %arg11[%c0_16, %c0_17] : memref<1x128xf32, #tpu.memory_space<vmem>>, vector<1x128xf32>
    %c0_18 = arith.constant 0 : index
    %c0_19 = arith.constant 0 : index
    %15 = vector.load %arg12[%c0_18, %c0_19] : memref<1x128xf32, #tpu.memory_space<vmem>>, vector<1x128xf32>
    %c0_20 = arith.constant 0 : index
    %c0_21 = arith.constant 0 : index
    %16 = vector.load %arg13[%c0_20, %c0_21] : memref<1x1xf32, #tpu.memory_space<vmem>>, vector<1x1xf32>
    %c0_22 = arith.constant 0 : index
    %c0_23 = arith.constant 0 : index
    %17 = vector.load %arg2[%c0_22, %c0_23] : memref<8x1xf32, #tpu.memory_space<vmem>>, vector<1x1xf32>
    %18 = vector.broadcast %17 : vector<1x1xf32> to vector<1x128xf32>
    %19 = arith.mulf %18, %8 : vector<1x128xf32>
    %20 = vector.broadcast %19 : vector<1x128xf32> to vector<8x128xf32>
    %21 = arith.addf %20, %7 : vector<8x128xf32>
    %cst = arith.constant 0.000000e+00 : f32
    %22 = vector.broadcast %cst : f32 to vector<8x128xf32>
    %23 = arith.maximumf %21, %22 : vector<8x128xf32>
    %24 = arith.truncf %23 : vector<8x128xf32> to vector<8x128xbf16>
    %cst_24 = arith.constant dense<0.000000e+00> : vector<8x128xf32>
    %25 = tpu.matmul %24, %9, %cst_24 {dimension_numbers = #tpu.dot_dimension_numbers<[1], [0], [0], [1], [0, 0, 1, 1], [], []>} : vector<8x128xbf16>, vector<128x128xbf16>, vector<8x128xf32> -> vector<8x128xf32>
    %26 = vector.broadcast %10 : vector<1x128xf32> to vector<8x128xf32>
    %27 = arith.addf %25, %26 : vector<8x128xf32>
    %cst_25 = arith.constant 0.000000e+00 : f32
    %28 = vector.broadcast %cst_25 : f32 to vector<8x128xf32>
    %29 = arith.maximumf %27, %28 : vector<8x128xf32>
    %30 = arith.truncf %29 : vector<8x128xf32> to vector<8x128xbf16>
    %cst_26 = arith.constant dense<0.000000e+00> : vector<8x128xf32>
    %31 = tpu.matmul %30, %11, %cst_26 {dimension_numbers = #tpu.dot_dimension_numbers<[1], [0], [0], [1], [0, 0, 1, 1], [], []>} : vector<8x128xbf16>, vector<128x128xbf16>, vector<8x128xf32> -> vector<8x128xf32>
    %32 = vector.broadcast %12 : vector<1x128xf32> to vector<8x128xf32>
    %33 = arith.addf %31, %32 : vector<8x128xf32>
    %cst_27 = arith.constant 0.000000e+00 : f32
    %34 = vector.broadcast %cst_27 : f32 to vector<8x128xf32>
    %35 = arith.maximumf %33, %34 : vector<8x128xf32>
    %36 = arith.truncf %35 : vector<8x128xf32> to vector<8x128xbf16>
    %cst_28 = arith.constant dense<0.000000e+00> : vector<8x128xf32>
    %37 = tpu.matmul %36, %13, %cst_28 {dimension_numbers = #tpu.dot_dimension_numbers<[1], [0], [0], [1], [0, 0, 1, 1], [], []>} : vector<8x128xbf16>, vector<128x128xbf16>, vector<8x128xf32> -> vector<8x128xf32>
    %38 = vector.broadcast %14 : vector<1x128xf32> to vector<8x128xf32>
    %39 = arith.addf %37, %38 : vector<8x128xf32>
    %cst_29 = arith.constant 0.000000e+00 : f32
    %40 = vector.broadcast %cst_29 : f32 to vector<8x128xf32>
    %41 = arith.maximumf %39, %40 : vector<8x128xf32>
    %cst_30 = arith.constant dense<0.000000e+00> : vector<1x8xf32>
    %42 = tpu.matmul %15, %41, %cst_30 {dimension_numbers = #tpu.dot_dimension_numbers<[1], [1], [0], [0], [0, 0, 1, 0], [], []>} : vector<1x128xf32>, vector<8x128xf32>, vector<1x8xf32> -> vector<1x8xf32>
    %43 = vector.broadcast %16 : vector<1x1xf32> to vector<1x8xf32>
    %44 = arith.addf %42, %43 : vector<1x8xf32>
    %c0_31 = arith.constant 0 : index
    %c0_32 = arith.constant 0 : index
    %45 = vector.load %arg15[%c0_31, %c0_32] : memref<8x8xf32, #tpu.memory_space<vmem>>, vector<1x8xf32>
    tpu.vector_store %arg15[%c0_31, %c0_32], %44 {strides = array<i32>} : memref<8x8xf32, #tpu.memory_space<vmem>>, vector<1x8xf32>,
    %cst_33 = arith.constant 0.000000e+00 : f32
    %46 = vector.broadcast %cst_33 : f32 to vector<1x8xf32>
    %47 = arith.subf %46, %44 : vector<1x8xf32>
    %48 = math.exp %47 : vector<1x8xf32>
    %cst_34 = arith.constant 1.000000e+00 : f32
    %49 = vector.broadcast %cst_34 : f32 to vector<1x8xf32>
    %50 = arith.addf %49, %48 : vector<1x8xf32>
    %51 = tpu.reciprocal %50 {approx = true} : vector<1x8xf32> -> vector<1x8xf32>
    %c0_35 = arith.constant 0 : index
    %c0_36 = arith.constant 0 : index
    %52 = vector.load %arg14[%c0_35, %c0_36] : memref<8x8xf32, #tpu.memory_space<vmem>>, vector<1x8xf32>
    tpu.vector_store %arg14[%c0_35, %c0_36], %51 {strides = array<i32>} : memref<8x8xf32, #tpu.memory_space<vmem>>, vector<1x8xf32>,
    %c1_37 = arith.constant 1 : index
    %c0_38 = arith.constant 0 : index
    %53 = vector.load %arg2[%c1_37, %c0_38] : memref<8x1xf32, #tpu.memory_space<vmem>>, vector<1x1xf32>
    %54 = vector.broadcast %53 : vector<1x1xf32> to vector<1x128xf32>
    %55 = arith.mulf %54, %8 : vector<1x128xf32>
    %56 = vector.broadcast %55 : vector<1x128xf32> to vector<8x128xf32>
    %57 = arith.addf %56, %7 : vector<8x128xf32>
    %cst_39 = arith.constant 0.000000e+00 : f32
    %58 = vector.broadcast %cst_39 : f32 to vector<8x128xf32>
    %59 = arith.maximumf %57, %58 : vector<8x128xf32>
    %60 = arith.truncf %59 : vector<8x128xf32> to vector<8x128xbf16>
    %cst_40 = arith.constant dense<0.000000e+00> : vector<8x128xf32>
    %61 = tpu.matmul %60, %9, %cst_40 {dimension_numbers = #tpu.dot_dimension_numbers<[1], [0], [0], [1], [0, 0, 1, 1], [], []>} : vector<8x128xbf16>, vector<128x128xbf16>, vector<8x128xf32> -> vector<8x128xf32>
    %62 = vector.broadcast %10 : vector<1x128xf32> to vector<8x128xf32>
    %63 = arith.addf %61, %62 : vector<8x128xf32>
    %cst_41 = arith.constant 0.000000e+00 : f32
    %64 = vector.broadcast %cst_41 : f32 to vector<8x128xf32>
    %65 = arith.maximumf %63, %64 : vector<8x128xf32>
    %66 = arith.truncf %65 : vector<8x128xf32> to vector<8x128xbf16>
    %cst_42 = arith.constant dense<0.000000e+00> : vector<8x128xf32>
    %67 = tpu.matmul %66, %11, %cst_42 {dimension_numbers = #tpu.dot_dimension_numbers<[1], [0], [0], [1], [0, 0, 1, 1], [], []>} : vector<8x128xbf16>, vector<128x128xbf16>, vector<8x128xf32> -> vector<8x128xf32>
    %68 = vector.broadcast %12 : vector<1x128xf32> to vector<8x128xf32>
    %69 = arith.addf %67, %68 : vector<8x128xf32>
    %cst_43 = arith.constant 0.000000e+00 : f32
    %70 = vector.broadcast %cst_43 : f32 to vector<8x128xf32>
    %71 = arith.maximumf %69, %70 : vector<8x128xf32>
    %72 = arith.truncf %71 : vector<8x128xf32> to vector<8x128xbf16>
    %cst_44 = arith.constant dense<0.000000e+00> : vector<8x128xf32>
    %73 = tpu.matmul %72, %13, %cst_44 {dimension_numbers = #tpu.dot_dimension_numbers<[1], [0], [0], [1], [0, 0, 1, 1], [], []>} : vector<8x128xbf16>, vector<128x128xbf16>, vector<8x128xf32> -> vector<8x128xf32>
    %74 = vector.broadcast %14 : vector<1x128xf32> to vector<8x128xf32>
    %75 = arith.addf %73, %74 : vector<8x128xf32>
    %cst_45 = arith.constant 0.000000e+00 : f32
    %76 = vector.broadcast %cst_45 : f32 to vector<8x128xf32>
    %77 = arith.maximumf %75, %76 : vector<8x128xf32>
    %cst_46 = arith.constant dense<0.000000e+00> : vector<1x8xf32>
    %78 = tpu.matmul %15, %77, %cst_46 {dimension_numbers = #tpu.dot_dimension_numbers<[1], [1], [0], [0], [0, 0, 1, 0], [], []>} : vector<1x128xf32>, vector<8x128xf32>, vector<1x8xf32> -> vector<1x8xf32>
    %79 = vector.broadcast %16 : vector<1x1xf32> to vector<1x8xf32>
    %80 = arith.addf %78, %79 : vector<1x8xf32>
    %c1_47 = arith.constant 1 : index
    %c0_48 = arith.constant 0 : index
    %81 = vector.load %arg15[%c1_47, %c0_48] : memref<8x8xf32, #tpu.memory_space<vmem>>, vector<1x8xf32>
    tpu.vector_store %arg15[%c1_47, %c0_48], %80 {strides = array<i32>} : memref<8x8xf32, #tpu.memory_space<vmem>>, vector<1x8xf32>,
    %cst_49 = arith.constant 0.000000e+00 : f32
    %82 = vector.broadcast %cst_49 : f32 to vector<1x8xf32>
    %83 = arith.subf %82, %80 : vector<1x8xf32>
    %84 = math.exp %83 : vector<1x8xf32>
    %cst_50 = arith.constant 1.000000e+00 : f32
    %85 = vector.broadcast %cst_50 : f32 to vector<1x8xf32>
    %86 = arith.addf %85, %84 : vector<1x8xf32>
    %87 = tpu.reciprocal %86 {approx = true} : vector<1x8xf32> -> vector<1x8xf32>
    %c1_51 = arith.constant 1 : index
    %c0_52 = arith.constant 0 : index
    %88 = vector.load %arg14[%c1_51, %c0_52] : memref<8x8xf32, #tpu.memory_space<vmem>>, vector<1x8xf32>
    tpu.vector_store %arg14[%c1_51, %c0_52], %87 {strides = array<i32>} : memref<8x8xf32, #tpu.memory_space<vmem>>, vector<1x8xf32>,
    %c2 = arith.constant 2 : index
    %c0_53 = arith.constant 0 : index
    %89 = vector.load %arg2[%c2, %c0_53] : memref<8x1xf32, #tpu.memory_space<vmem>>, vector<1x1xf32>
    %90 = vector.broadcast %89 : vector<1x1xf32> to vector<1x128xf32>
    %91 = arith.mulf %90, %8 : vector<1x128xf32>
    %92 = vector.broadcast %91 : vector<1x128xf32> to vector<8x128xf32>
    %93 = arith.addf %92, %7 : vector<8x128xf32>
    %cst_54 = arith.constant 0.000000e+00 : f32
    %94 = vector.broadcast %cst_54 : f32 to vector<8x128xf32>
    %95 = arith.maximumf %93, %94 : vector<8x128xf32>
    %96 = arith.truncf %95 : vector<8x128xf32> to vector<8x128xbf16>
    %cst_55 = arith.constant dense<0.000000e+00> : vector<8x128xf32>
    %97 = tpu.matmul %96, %9, %cst_55 {dimension_numbers = #tpu.dot_dimension_numbers<[1], [0], [0], [1], [0, 0, 1, 1], [], []>} : vector<8x128xbf16>, vector<128x128xbf16>, vector<8x128xf32> -> vector<8x128xf32>
    %98 = vector.broadcast %10 : vector<1x128xf32> to vector<8x128xf32>
    %99 = arith.addf %97, %98 : vector<8x128xf32>
    %cst_56 = arith.constant 0.000000e+00 : f32
    %100 = vector.broadcast %cst_56 : f32 to vector<8x128xf32>
    %101 = arith.maximumf %99, %100 : vector<8x128xf32>
    %102 = arith.truncf %101 : vector<8x128xf32> to vector<8x128xbf16>
    %cst_57 = arith.constant dense<0.000000e+00> : vector<8x128xf32>
    %103 = tpu.matmul %102, %11, %cst_57 {dimension_numbers = #tpu.dot_dimension_numbers<[1], [0], [0], [1], [0, 0, 1, 1], [], []>} : vector<8x128xbf16>, vector<128x128xbf16>, vector<8x128xf32> -> vector<8x128xf32>
    %104 = vector.broadcast %12 : vector<1x128xf32> to vector<8x128xf32>
    %105 = arith.addf %103, %104 : vector<8x128xf32>
    %cst_58 = arith.constant 0.000000e+00 : f32
    %106 = vector.broadcast %cst_58 : f32 to vector<8x128xf32>
    %107 = arith.maximumf %105, %106 : vector<8x128xf32>
    %108 = arith.truncf %107 : vector<8x128xf32> to vector<8x128xbf16>
    %cst_59 = arith.constant dense<0.000000e+00> : vector<8x128xf32>
    %109 = tpu.matmul %108, %13, %cst_59 {dimension_numbers = #tpu.dot_dimension_numbers<[1], [0], [0], [1], [0, 0, 1, 1], [], []>} : vector<8x128xbf16>, vector<128x128xbf16>, vector<8x128xf32> -> vector<8x128xf32>
    %110 = vector.broadcast %14 : vector<1x128xf32> to vector<8x128xf32>
    %111 = arith.addf %109, %110 : vector<8x128xf32>
    %cst_60 = arith.constant 0.000000e+00 : f32
    %112 = vector.broadcast %cst_60 : f32 to vector<8x128xf32>
    %113 = arith.maximumf %111, %112 : vector<8x128xf32>
    %cst_61 = arith.constant dense<0.000000e+00> : vector<1x8xf32>
    %114 = tpu.matmul %15, %113, %cst_61 {dimension_numbers = #tpu.dot_dimension_numbers<[1], [1], [0], [0], [0, 0, 1, 0], [], []>} : vector<1x128xf32>, vector<8x128xf32>, vector<1x8xf32> -> vector<1x8xf32>
    %115 = vector.broadcast %16 : vector<1x1xf32> to vector<1x8xf32>
    %116 = arith.addf %114, %115 : vector<1x8xf32>
    %c2_62 = arith.constant 2 : index
    %c0_63 = arith.constant 0 : index
    %117 = vector.load %arg15[%c2_62, %c0_63] : memref<8x8xf32, #tpu.memory_space<vmem>>, vector<1x8xf32>
    tpu.vector_store %arg15[%c2_62, %c0_63], %116 {strides = array<i32>} : memref<8x8xf32, #tpu.memory_space<vmem>>, vector<1x8xf32>,
    %cst_64 = arith.constant 0.000000e+00 : f32
    %118 = vector.broadcast %cst_64 : f32 to vector<1x8xf32>
    %119 = arith.subf %118, %116 : vector<1x8xf32>
    %120 = math.exp %119 : vector<1x8xf32>
    %cst_65 = arith.constant 1.000000e+00 : f32
    %121 = vector.broadcast %cst_65 : f32 to vector<1x8xf32>
    %122 = arith.addf %121, %120 : vector<1x8xf32>
    %123 = tpu.reciprocal %122 {approx = true} : vector<1x8xf32> -> vector<1x8xf32>
    %c2_66 = arith.constant 2 : index
    %c0_67 = arith.constant 0 : index
    %124 = vector.load %arg14[%c2_66, %c0_67] : memref<8x8xf32, #tpu.memory_space<vmem>>, vector<1x8xf32>
    tpu.vector_store %arg14[%c2_66, %c0_67], %123 {strides = array<i32>} : memref<8x8xf32, #tpu.memory_space<vmem>>, vector<1x8xf32>,
    %c3 = arith.constant 3 : index
    %c0_68 = arith.constant 0 : index
    %125 = vector.load %arg2[%c3, %c0_68] : memref<8x1xf32, #tpu.memory_space<vmem>>, vector<1x1xf32>
    %126 = vector.broadcast %125 : vector<1x1xf32> to vector<1x128xf32>
    %127 = arith.mulf %126, %8 : vector<1x128xf32>
    %128 = vector.broadcast %127 : vector<1x128xf32> to vector<8x128xf32>
    %129 = arith.addf %128, %7 : vector<8x128xf32>
    %cst_69 = arith.constant 0.000000e+00 : f32
    %130 = vector.broadcast %cst_69 : f32 to vector<8x128xf32>
    %131 = arith.maximumf %129, %130 : vector<8x128xf32>
    %132 = arith.truncf %131 : vector<8x128xf32> to vector<8x128xbf16>
    %cst_70 = arith.constant dense<0.000000e+00> : vector<8x128xf32>
    %133 = tpu.matmul %132, %9, %cst_70 {dimension_numbers = #tpu.dot_dimension_numbers<[1], [0], [0], [1], [0, 0, 1, 1], [], []>} : vector<8x128xbf16>, vector<128x128xbf16>, vector<8x128xf32> -> vector<8x128xf32>
    %134 = vector.broadcast %10 : vector<1x128xf32> to vector<8x128xf32>
    %135 = arith.addf %133, %134 : vector<8x128xf32>
    %cst_71 = arith.constant 0.000000e+00 : f32
    %136 = vector.broadcast %cst_71 : f32 to vector<8x128xf32>
    %137 = arith.maximumf %135, %136 : vector<8x128xf32>
    %138 = arith.truncf %137 : vector<8x128xf32> to vector<8x128xbf16>
    %cst_72 = arith.constant dense<0.000000e+00> : vector<8x128xf32>
    %139 = tpu.matmul %138, %11, %cst_72 {dimension_numbers = #tpu.dot_dimension_numbers<[1], [0], [0], [1], [0, 0, 1, 1], [], []>} : vector<8x128xbf16>, vector<128x128xbf16>, vector<8x128xf32> -> vector<8x128xf32>
    %140 = vector.broadcast %12 : vector<1x128xf32> to vector<8x128xf32>
    %141 = arith.addf %139, %140 : vector<8x128xf32>
    %cst_73 = arith.constant 0.000000e+00 : f32
    %142 = vector.broadcast %cst_73 : f32 to vector<8x128xf32>
    %143 = arith.maximumf %141, %142 : vector<8x128xf32>
    %144 = arith.truncf %143 : vector<8x128xf32> to vector<8x128xbf16>
    %cst_74 = arith.constant dense<0.000000e+00> : vector<8x128xf32>
    %145 = tpu.matmul %144, %13, %cst_74 {dimension_numbers = #tpu.dot_dimension_numbers<[1], [0], [0], [1], [0, 0, 1, 1], [], []>} : vector<8x128xbf16>, vector<128x128xbf16>, vector<8x128xf32> -> vector<8x128xf32>
    %146 = vector.broadcast %14 : vector<1x128xf32> to vector<8x128xf32>
    %147 = arith.addf %145, %146 : vector<8x128xf32>
    %cst_75 = arith.constant 0.000000e+00 : f32
    %148 = vector.broadcast %cst_75 : f32 to vector<8x128xf32>
    %149 = arith.maximumf %147, %148 : vector<8x128xf32>
    %cst_76 = arith.constant dense<0.000000e+00> : vector<1x8xf32>
    %150 = tpu.matmul %15, %149, %cst_76 {dimension_numbers = #tpu.dot_dimension_numbers<[1], [1], [0], [0], [0, 0, 1, 0], [], []>} : vector<1x128xf32>, vector<8x128xf32>, vector<1x8xf32> -> vector<1x8xf32>
    %151 = vector.broadcast %16 : vector<1x1xf32> to vector<1x8xf32>
    %152 = arith.addf %150, %151 : vector<1x8xf32>
    %c3_77 = arith.constant 3 : index
    %c0_78 = arith.constant 0 : index
    %153 = vector.load %arg15[%c3_77, %c0_78] : memref<8x8xf32, #tpu.memory_space<vmem>>, vector<1x8xf32>
    tpu.vector_store %arg15[%c3_77, %c0_78], %152 {strides = array<i32>} : memref<8x8xf32, #tpu.memory_space<vmem>>, vector<1x8xf32>,
    %cst_79 = arith.constant 0.000000e+00 : f32
    %154 = vector.broadcast %cst_79 : f32 to vector<1x8xf32>
    %155 = arith.subf %154, %152 : vector<1x8xf32>
    %156 = math.exp %155 : vector<1x8xf32>
    %cst_80 = arith.constant 1.000000e+00 : f32
    %157 = vector.broadcast %cst_80 : f32 to vector<1x8xf32>
    %158 = arith.addf %157, %156 : vector<1x8xf32>
    %159 = tpu.reciprocal %158 {approx = true} : vector<1x8xf32> -> vector<1x8xf32>
    %c3_81 = arith.constant 3 : index
    %c0_82 = arith.constant 0 : index
    %160 = vector.load %arg14[%c3_81, %c0_82] : memref<8x8xf32, #tpu.memory_space<vmem>>, vector<1x8xf32>
    tpu.vector_store %arg14[%c3_81, %c0_82], %159 {strides = array<i32>} : memref<8x8xf32, #tpu.memory_space<vmem>>, vector<1x8xf32>,
    %c4 = arith.constant 4 : index
    %c0_83 = arith.constant 0 : index
    %161 = vector.load %arg2[%c4, %c0_83] : memref<8x1xf32, #tpu.memory_space<vmem>>, vector<1x1xf32>
    %162 = vector.broadcast %161 : vector<1x1xf32> to vector<1x128xf32>
    %163 = arith.mulf %162, %8 : vector<1x128xf32>
    %164 = vector.broadcast %163 : vector<1x128xf32> to vector<8x128xf32>
    %165 = arith.addf %164, %7 : vector<8x128xf32>
    %cst_84 = arith.constant 0.000000e+00 : f32
    %166 = vector.broadcast %cst_84 : f32 to vector<8x128xf32>
    %167 = arith.maximumf %165, %166 : vector<8x128xf32>
    %168 = arith.truncf %167 : vector<8x128xf32> to vector<8x128xbf16>
    %cst_85 = arith.constant dense<0.000000e+00> : vector<8x128xf32>
    %169 = tpu.matmul %168, %9, %cst_85 {dimension_numbers = #tpu.dot_dimension_numbers<[1], [0], [0], [1], [0, 0, 1, 1], [], []>} : vector<8x128xbf16>, vector<128x128xbf16>, vector<8x128xf32> -> vector<8x128xf32>
    %170 = vector.broadcast %10 : vector<1x128xf32> to vector<8x128xf32>
    %171 = arith.addf %169, %170 : vector<8x128xf32>
    %cst_86 = arith.constant 0.000000e+00 : f32
    %172 = vector.broadcast %cst_86 : f32 to vector<8x128xf32>
    %173 = arith.maximumf %171, %172 : vector<8x128xf32>
    %174 = arith.truncf %173 : vector<8x128xf32> to vector<8x128xbf16>
    %cst_87 = arith.constant dense<0.000000e+00> : vector<8x128xf32>
    %175 = tpu.matmul %174, %11, %cst_87 {dimension_numbers = #tpu.dot_dimension_numbers<[1], [0], [0], [1], [0, 0, 1, 1], [], []>} : vector<8x128xbf16>, vector<128x128xbf16>, vector<8x128xf32> -> vector<8x128xf32>
    %176 = vector.broadcast %12 : vector<1x128xf32> to vector<8x128xf32>
    %177 = arith.addf %175, %176 : vector<8x128xf32>
    %cst_88 = arith.constant 0.000000e+00 : f32
    %178 = vector.broadcast %cst_88 : f32 to vector<8x128xf32>
    %179 = arith.maximumf %177, %178 : vector<8x128xf32>
    %180 = arith.truncf %179 : vector<8x128xf32> to vector<8x128xbf16>
    %cst_89 = arith.constant dense<0.000000e+00> : vector<8x128xf32>
    %181 = tpu.matmul %180, %13, %cst_89 {dimension_numbers = #tpu.dot_dimension_numbers<[1], [0], [0], [1], [0, 0, 1, 1], [], []>} : vector<8x128xbf16>, vector<128x128xbf16>, vector<8x128xf32> -> vector<8x128xf32>
    %182 = vector.broadcast %14 : vector<1x128xf32> to vector<8x128xf32>
    %183 = arith.addf %181, %182 : vector<8x128xf32>
    %cst_90 = arith.constant 0.000000e+00 : f32
    %184 = vector.broadcast %cst_90 : f32 to vector<8x128xf32>
    %185 = arith.maximumf %183, %184 : vector<8x128xf32>
    %cst_91 = arith.constant dense<0.000000e+00> : vector<1x8xf32>
    %186 = tpu.matmul %15, %185, %cst_91 {dimension_numbers = #tpu.dot_dimension_numbers<[1], [1], [0], [0], [0, 0, 1, 0], [], []>} : vector<1x128xf32>, vector<8x128xf32>, vector<1x8xf32> -> vector<1x8xf32>
    %187 = vector.broadcast %16 : vector<1x1xf32> to vector<1x8xf32>
    %188 = arith.addf %186, %187 : vector<1x8xf32>
    %c4_92 = arith.constant 4 : index
    %c0_93 = arith.constant 0 : index
    %189 = vector.load %arg15[%c4_92, %c0_93] : memref<8x8xf32, #tpu.memory_space<vmem>>, vector<1x8xf32>
    tpu.vector_store %arg15[%c4_92, %c0_93], %188 {strides = array<i32>} : memref<8x8xf32, #tpu.memory_space<vmem>>, vector<1x8xf32>,
    %cst_94 = arith.constant 0.000000e+00 : f32
    %190 = vector.broadcast %cst_94 : f32 to vector<1x8xf32>
    %191 = arith.subf %190, %188 : vector<1x8xf32>
    %192 = math.exp %191 : vector<1x8xf32>
    %cst_95 = arith.constant 1.000000e+00 : f32
    %193 = vector.broadcast %cst_95 : f32 to vector<1x8xf32>
    %194 = arith.addf %193, %192 : vector<1x8xf32>
    %195 = tpu.reciprocal %194 {approx = true} : vector<1x8xf32> -> vector<1x8xf32>
    %c4_96 = arith.constant 4 : index
    %c0_97 = arith.constant 0 : index
    %196 = vector.load %arg14[%c4_96, %c0_97] : memref<8x8xf32, #tpu.memory_space<vmem>>, vector<1x8xf32>
    tpu.vector_store %arg14[%c4_96, %c0_97], %195 {strides = array<i32>} : memref<8x8xf32, #tpu.memory_space<vmem>>, vector<1x8xf32>,
    %c5 = arith.constant 5 : index
    %c0_98 = arith.constant 0 : index
    %197 = vector.load %arg2[%c5, %c0_98] : memref<8x1xf32, #tpu.memory_space<vmem>>, vector<1x1xf32>
    %198 = vector.broadcast %197 : vector<1x1xf32> to vector<1x128xf32>
    %199 = arith.mulf %198, %8 : vector<1x128xf32>
    %200 = vector.broadcast %199 : vector<1x128xf32> to vector<8x128xf32>
    %201 = arith.addf %200, %7 : vector<8x128xf32>
    %cst_99 = arith.constant 0.000000e+00 : f32
    %202 = vector.broadcast %cst_99 : f32 to vector<8x128xf32>
    %203 = arith.maximumf %201, %202 : vector<8x128xf32>
    %204 = arith.truncf %203 : vector<8x128xf32> to vector<8x128xbf16>
    %cst_100 = arith.constant dense<0.000000e+00> : vector<8x128xf32>
    %205 = tpu.matmul %204, %9, %cst_100 {dimension_numbers = #tpu.dot_dimension_numbers<[1], [0], [0], [1], [0, 0, 1, 1], [], []>} : vector<8x128xbf16>, vector<128x128xbf16>, vector<8x128xf32> -> vector<8x128xf32>
    %206 = vector.broadcast %10 : vector<1x128xf32> to vector<8x128xf32>
    %207 = arith.addf %205, %206 : vector<8x128xf32>
    %cst_101 = arith.constant 0.000000e+00 : f32
    %208 = vector.broadcast %cst_101 : f32 to vector<8x128xf32>
    %209 = arith.maximumf %207, %208 : vector<8x128xf32>
    %210 = arith.truncf %209 : vector<8x128xf32> to vector<8x128xbf16>
    %cst_102 = arith.constant dense<0.000000e+00> : vector<8x128xf32>
    %211 = tpu.matmul %210, %11, %cst_102 {dimension_numbers = #tpu.dot_dimension_numbers<[1], [0], [0], [1], [0, 0, 1, 1], [], []>} : vector<8x128xbf16>, vector<128x128xbf16>, vector<8x128xf32> -> vector<8x128xf32>
    %212 = vector.broadcast %12 : vector<1x128xf32> to vector<8x128xf32>
    %213 = arith.addf %211, %212 : vector<8x128xf32>
    %cst_103 = arith.constant 0.000000e+00 : f32
    %214 = vector.broadcast %cst_103 : f32 to vector<8x128xf32>
    %215 = arith.maximumf %213, %214 : vector<8x128xf32>
    %216 = arith.truncf %215 : vector<8x128xf32> to vector<8x128xbf16>
    %cst_104 = arith.constant dense<0.000000e+00> : vector<8x128xf32>
    %217 = tpu.matmul %216, %13, %cst_104 {dimension_numbers = #tpu.dot_dimension_numbers<[1], [0], [0], [1], [0, 0, 1, 1], [], []>} : vector<8x128xbf16>, vector<128x128xbf16>, vector<8x128xf32> -> vector<8x128xf32>
    %218 = vector.broadcast %14 : vector<1x128xf32> to vector<8x128xf32>
    %219 = arith.addf %217, %218 : vector<8x128xf32>
    %cst_105 = arith.constant 0.000000e+00 : f32
    %220 = vector.broadcast %cst_105 : f32 to vector<8x128xf32>
    %221 = arith.maximumf %219, %220 : vector<8x128xf32>
    %cst_106 = arith.constant dense<0.000000e+00> : vector<1x8xf32>
    %222 = tpu.matmul %15, %221, %cst_106 {dimension_numbers = #tpu.dot_dimension_numbers<[1], [1], [0], [0], [0, 0, 1, 0], [], []>} : vector<1x128xf32>, vector<8x128xf32>, vector<1x8xf32> -> vector<1x8xf32>
    %223 = vector.broadcast %16 : vector<1x1xf32> to vector<1x8xf32>
    %224 = arith.addf %222, %223 : vector<1x8xf32>
    %c5_107 = arith.constant 5 : index
    %c0_108 = arith.constant 0 : index
    %225 = vector.load %arg15[%c5_107, %c0_108] : memref<8x8xf32, #tpu.memory_space<vmem>>, vector<1x8xf32>
    tpu.vector_store %arg15[%c5_107, %c0_108], %224 {strides = array<i32>} : memref<8x8xf32, #tpu.memory_space<vmem>>, vector<1x8xf32>,
    %cst_109 = arith.constant 0.000000e+00 : f32
    %226 = vector.broadcast %cst_109 : f32 to vector<1x8xf32>
    %227 = arith.subf %226, %224 : vector<1x8xf32>
    %228 = math.exp %227 : vector<1x8xf32>
    %cst_110 = arith.constant 1.000000e+00 : f32
    %229 = vector.broadcast %cst_110 : f32 to vector<1x8xf32>
    %230 = arith.addf %229, %228 : vector<1x8xf32>
    %231 = tpu.reciprocal %230 {approx = true} : vector<1x8xf32> -> vector<1x8xf32>
    %c5_111 = arith.constant 5 : index
    %c0_112 = arith.constant 0 : index
    %232 = vector.load %arg14[%c5_111, %c0_112] : memref<8x8xf32, #tpu.memory_space<vmem>>, vector<1x8xf32>
    tpu.vector_store %arg14[%c5_111, %c0_112], %231 {strides = array<i32>} : memref<8x8xf32, #tpu.memory_space<vmem>>, vector<1x8xf32>,
    %c6 = arith.constant 6 : index
    %c0_113 = arith.constant 0 : index
    %233 = vector.load %arg2[%c6, %c0_113] : memref<8x1xf32, #tpu.memory_space<vmem>>, vector<1x1xf32>
    %234 = vector.broadcast %233 : vector<1x1xf32> to vector<1x128xf32>
    %235 = arith.mulf %234, %8 : vector<1x128xf32>
    %236 = vector.broadcast %235 : vector<1x128xf32> to vector<8x128xf32>
    %237 = arith.addf %236, %7 : vector<8x128xf32>
    %cst_114 = arith.constant 0.000000e+00 : f32
    %238 = vector.broadcast %cst_114 : f32 to vector<8x128xf32>
    %239 = arith.maximumf %237, %238 : vector<8x128xf32>
    %240 = arith.truncf %239 : vector<8x128xf32> to vector<8x128xbf16>
    %cst_115 = arith.constant dense<0.000000e+00> : vector<8x128xf32>
    %241 = tpu.matmul %240, %9, %cst_115 {dimension_numbers = #tpu.dot_dimension_numbers<[1], [0], [0], [1], [0, 0, 1, 1], [], []>} : vector<8x128xbf16>, vector<128x128xbf16>, vector<8x128xf32> -> vector<8x128xf32>
    %242 = vector.broadcast %10 : vector<1x128xf32> to vector<8x128xf32>
    %243 = arith.addf %241, %242 : vector<8x128xf32>
    %cst_116 = arith.constant 0.000000e+00 : f32
    %244 = vector.broadcast %cst_116 : f32 to vector<8x128xf32>
    %245 = arith.maximumf %243, %244 : vector<8x128xf32>
    %246 = arith.truncf %245 : vector<8x128xf32> to vector<8x128xbf16>
    %cst_117 = arith.constant dense<0.000000e+00> : vector<8x128xf32>
    %247 = tpu.matmul %246, %11, %cst_117 {dimension_numbers = #tpu.dot_dimension_numbers<[1], [0], [0], [1], [0, 0, 1, 1], [], []>} : vector<8x128xbf16>, vector<128x128xbf16>, vector<8x128xf32> -> vector<8x128xf32>
    %248 = vector.broadcast %12 : vector<1x128xf32> to vector<8x128xf32>
    %249 = arith.addf %247, %248 : vector<8x128xf32>
    %cst_118 = arith.constant 0.000000e+00 : f32
    %250 = vector.broadcast %cst_118 : f32 to vector<8x128xf32>
    %251 = arith.maximumf %249, %250 : vector<8x128xf32>
    %252 = arith.truncf %251 : vector<8x128xf32> to vector<8x128xbf16>
    %cst_119 = arith.constant dense<0.000000e+00> : vector<8x128xf32>
    %253 = tpu.matmul %252, %13, %cst_119 {dimension_numbers = #tpu.dot_dimension_numbers<[1], [0], [0], [1], [0, 0, 1, 1], [], []>} : vector<8x128xbf16>, vector<128x128xbf16>, vector<8x128xf32> -> vector<8x128xf32>
    %254 = vector.broadcast %14 : vector<1x128xf32> to vector<8x128xf32>
    %255 = arith.addf %253, %254 : vector<8x128xf32>
    %cst_120 = arith.constant 0.000000e+00 : f32
    %256 = vector.broadcast %cst_120 : f32 to vector<8x128xf32>
    %257 = arith.maximumf %255, %256 : vector<8x128xf32>
    %cst_121 = arith.constant dense<0.000000e+00> : vector<1x8xf32>
    %258 = tpu.matmul %15, %257, %cst_121 {dimension_numbers = #tpu.dot_dimension_numbers<[1], [1], [0], [0], [0, 0, 1, 0], [], []>} : vector<1x128xf32>, vector<8x128xf32>, vector<1x8xf32> -> vector<1x8xf32>
    %259 = vector.broadcast %16 : vector<1x1xf32> to vector<1x8xf32>
    %260 = arith.addf %258, %259 : vector<1x8xf32>
    %c6_122 = arith.constant 6 : index
    %c0_123 = arith.constant 0 : index
    %261 = vector.load %arg15[%c6_122, %c0_123] : memref<8x8xf32, #tpu.memory_space<vmem>>, vector<1x8xf32>
    tpu.vector_store %arg15[%c6_122, %c0_123], %260 {strides = array<i32>} : memref<8x8xf32, #tpu.memory_space<vmem>>, vector<1x8xf32>,
    %cst_124 = arith.constant 0.000000e+00 : f32
    %262 = vector.broadcast %cst_124 : f32 to vector<1x8xf32>
    %263 = arith.subf %262, %260 : vector<1x8xf32>
    %264 = math.exp %263 : vector<1x8xf32>
    %cst_125 = arith.constant 1.000000e+00 : f32
    %265 = vector.broadcast %cst_125 : f32 to vector<1x8xf32>
    %266 = arith.addf %265, %264 : vector<1x8xf32>
    %267 = tpu.reciprocal %266 {approx = true} : vector<1x8xf32> -> vector<1x8xf32>
    %c6_126 = arith.constant 6 : index
    %c0_127 = arith.constant 0 : index
    %268 = vector.load %arg14[%c6_126, %c0_127] : memref<8x8xf32, #tpu.memory_space<vmem>>, vector<1x8xf32>
    tpu.vector_store %arg14[%c6_126, %c0_127], %267 {strides = array<i32>} : memref<8x8xf32, #tpu.memory_space<vmem>>, vector<1x8xf32>,
    %c7 = arith.constant 7 : index
    %c0_128 = arith.constant 0 : index
    %269 = vector.load %arg2[%c7, %c0_128] : memref<8x1xf32, #tpu.memory_space<vmem>>, vector<1x1xf32>
    %270 = vector.broadcast %269 : vector<1x1xf32> to vector<1x128xf32>
    %271 = arith.mulf %270, %8 : vector<1x128xf32>
    %272 = vector.broadcast %271 : vector<1x128xf32> to vector<8x128xf32>
    %273 = arith.addf %272, %7 : vector<8x128xf32>
    %cst_129 = arith.constant 0.000000e+00 : f32
    %274 = vector.broadcast %cst_129 : f32 to vector<8x128xf32>
    %275 = arith.maximumf %273, %274 : vector<8x128xf32>
    %276 = arith.truncf %275 : vector<8x128xf32> to vector<8x128xbf16>
    %cst_130 = arith.constant dense<0.000000e+00> : vector<8x128xf32>
    %277 = tpu.matmul %276, %9, %cst_130 {dimension_numbers = #tpu.dot_dimension_numbers<[1], [0], [0], [1], [0, 0, 1, 1], [], []>} : vector<8x128xbf16>, vector<128x128xbf16>, vector<8x128xf32> -> vector<8x128xf32>
    %278 = vector.broadcast %10 : vector<1x128xf32> to vector<8x128xf32>
    %279 = arith.addf %277, %278 : vector<8x128xf32>
    %cst_131 = arith.constant 0.000000e+00 : f32
    %280 = vector.broadcast %cst_131 : f32 to vector<8x128xf32>
    %281 = arith.maximumf %279, %280 : vector<8x128xf32>
    %282 = arith.truncf %281 : vector<8x128xf32> to vector<8x128xbf16>
    %cst_132 = arith.constant dense<0.000000e+00> : vector<8x128xf32>
    %283 = tpu.matmul %282, %11, %cst_132 {dimension_numbers = #tpu.dot_dimension_numbers<[1], [0], [0], [1], [0, 0, 1, 1], [], []>} : vector<8x128xbf16>, vector<128x128xbf16>, vector<8x128xf32> -> vector<8x128xf32>
    %284 = vector.broadcast %12 : vector<1x128xf32> to vector<8x128xf32>
    %285 = arith.addf %283, %284 : vector<8x128xf32>
    %cst_133 = arith.constant 0.000000e+00 : f32
    %286 = vector.broadcast %cst_133 : f32 to vector<8x128xf32>
    %287 = arith.maximumf %285, %286 : vector<8x128xf32>
    %288 = arith.truncf %287 : vector<8x128xf32> to vector<8x128xbf16>
    %cst_134 = arith.constant dense<0.000000e+00> : vector<8x128xf32>
    %289 = tpu.matmul %288, %13, %cst_134 {dimension_numbers = #tpu.dot_dimension_numbers<[1], [0], [0], [1], [0, 0, 1, 1], [], []>} : vector<8x128xbf16>, vector<128x128xbf16>, vector<8x128xf32> -> vector<8x128xf32>
    %290 = vector.broadcast %14 : vector<1x128xf32> to vector<8x128xf32>
    %291 = arith.addf %289, %290 : vector<8x128xf32>
    %cst_135 = arith.constant 0.000000e+00 : f32
    %292 = vector.broadcast %cst_135 : f32 to vector<8x128xf32>
    %293 = arith.maximumf %291, %292 : vector<8x128xf32>
    %cst_136 = arith.constant dense<0.000000e+00> : vector<1x8xf32>
    %294 = tpu.matmul %15, %293, %cst_136 {dimension_numbers = #tpu.dot_dimension_numbers<[1], [1], [0], [0], [0, 0, 1, 0], [], []>} : vector<1x128xf32>, vector<8x128xf32>, vector<1x8xf32> -> vector<1x8xf32>
    %295 = vector.broadcast %16 : vector<1x1xf32> to vector<1x8xf32>
    %296 = arith.addf %294, %295 : vector<1x8xf32>
    %c7_137 = arith.constant 7 : index
    %c0_138 = arith.constant 0 : index
    %297 = vector.load %arg15[%c7_137, %c0_138] : memref<8x8xf32, #tpu.memory_space<vmem>>, vector<1x8xf32>
    tpu.vector_store %arg15[%c7_137, %c0_138], %296 {strides = array<i32>} : memref<8x8xf32, #tpu.memory_space<vmem>>, vector<1x8xf32>,
    %cst_139 = arith.constant 0.000000e+00 : f32
    %298 = vector.broadcast %cst_139 : f32 to vector<1x8xf32>
    %299 = arith.subf %298, %296 : vector<1x8xf32>
    %300 = math.exp %299 : vector<1x8xf32>
    %cst_140 = arith.constant 1.000000e+00 : f32
    %301 = vector.broadcast %cst_140 : f32 to vector<1x8xf32>
    %302 = arith.addf %301, %300 : vector<1x8xf32>
    %303 = tpu.reciprocal %302 {approx = true} : vector<1x8xf32> -> vector<1x8xf32>
    %c7_141 = arith.constant 7 : index
    %c0_142 = arith.constant 0 : index
    %304 = vector.load %arg14[%c7_141, %c0_142] : memref<8x8xf32, #tpu.memory_space<vmem>>, vector<1x8xf32>
    tpu.vector_store %arg14[%c7_141, %c0_142], %303 {strides = array<i32>} : memref<8x8xf32, #tpu.memory_space<vmem>>, vector<1x8xf32>,
    return
  }
  func.func @transform_0(%arg0: i32, %arg1: i32) -> (i32, i32) {
    %c0_i32 = arith.constant 0 : i32
    %c0_i32_0 = arith.constant 0 : i32
    return %arg0, %c0_i32 : i32, i32
  }
  func.func @transform_1(%arg0: i32, %arg1: i32) -> (i32, i32) {
    %c0_i32 = arith.constant 0 : i32
    %c0_i32_0 = arith.constant 0 : i32
    return %arg1, %c0_i32 : i32, i32
  }
  func.func @transform_2(%arg0: i32, %arg1: i32) -> (i32, i32) {
    %c0_i32 = arith.constant 0 : i32
    %c0_i32_0 = arith.constant 0 : i32
    %c0_i32_1 = arith.constant 0 : i32
    return %c0_i32, %c0_i32_0 : i32, i32
  }
  func.func @transform_3(%arg0: i32, %arg1: i32) -> (i32, i32) {
    %c0_i32 = arith.constant 0 : i32
    %c0_i32_0 = arith.constant 0 : i32
    %c0_i32_1 = arith.constant 0 : i32
    return %c0_i32, %c0_i32_0 : i32, i32
  }
  func.func @transform_4(%arg0: i32, %arg1: i32) -> (i32, i32) {
    %c0_i32 = arith.constant 0 : i32
    %c0_i32_0 = arith.constant 0 : i32
    %c0_i32_1 = arith.constant 0 : i32
    return %c0_i32, %c0_i32_0 : i32, i32
  }
  func.func @transform_5(%arg0: i32, %arg1: i32) -> (i32, i32) {
    %c0_i32 = arith.constant 0 : i32
    %c0_i32_0 = arith.constant 0 : i32
    %c0_i32_1 = arith.constant 0 : i32
    return %c0_i32, %c0_i32_0 : i32, i32
  }
  func.func @transform_6(%arg0: i32, %arg1: i32) -> (i32, i32) {
    %c0_i32 = arith.constant 0 : i32
    %c0_i32_0 = arith.constant 0 : i32
    %c0_i32_1 = arith.constant 0 : i32
    return %c0_i32, %c0_i32_0 : i32, i32
  }
  func.func @transform_7(%arg0: i32, %arg1: i32) -> (i32, i32) {
    %c0_i32 = arith.constant 0 : i32
    %c0_i32_0 = arith.constant 0 : i32
    %c0_i32_1 = arith.constant 0 : i32
    return %c0_i32, %c0_i32_0 : i32, i32
  }
  func.func @transform_8(%arg0: i32, %arg1: i32) -> (i32, i32) {
    %c0_i32 = arith.constant 0 : i32
    %c0_i32_0 = arith.constant 0 : i32
    %c0_i32_1 = arith.constant 0 : i32
    return %c0_i32, %c0_i32_0 : i32, i32
  }
  func.func @transform_9(%arg0: i32, %arg1: i32) -> (i32, i32) {
    %c0_i32 = arith.constant 0 : i32
    %c0_i32_0 = arith.constant 0 : i32
    %c0_i32_1 = arith.constant 0 : i32
    return %c0_i32, %c0_i32_0 : i32, i32
  }
  func.func @transform_10(%arg0: i32, %arg1: i32) -> (i32, i32) {
    %c0_i32 = arith.constant 0 : i32
    %c0_i32_0 = arith.constant 0 : i32
    %c0_i32_1 = arith.constant 0 : i32
    return %c0_i32, %c0_i32_0 : i32, i32
  }
  func.func @transform_11(%arg0: i32, %arg1: i32) -> (i32, i32) {
    %c0_i32 = arith.constant 0 : i32
    %c0_i32_0 = arith.constant 0 : i32
    %c0_i32_1 = arith.constant 0 : i32
    return %c0_i32, %c0_i32_0 : i32, i32
  }
  func.func @transform_12(%arg0: i32, %arg1: i32) -> (i32, i32) {
    %c0_i32 = arith.constant 0 : i32
    return %arg0, %arg1 : i32, i32
  }
  func.func @transform_13(%arg0: i32, %arg1: i32) -> (i32, i32) {
    %c0_i32 = arith.constant 0 : i32
    return %arg0, %arg1 : i32, i32
  }
}

</mosaic_0001>

<llo_original>
// kernel: concat_critic1_forward.1
$region0: #{concat_critic1_forward.1}
  #allocation0 [shape = 'u32[]', space=smem, size = 0x4, offset = 0x4, fixed_abs, tag = 'smem constant byte address 0x4 - core index']
  #allocation1 [shape = 'u32[72,128]{1,0:T(1,128)}', space=vmem, size = 0x9000, scoped, tag = 'internal scratch']
  #allocation2 [shape = 'f32[1,1]{1,0:T(1,128)S(1)}', space=vmem, size = 0x200, scoped, tag = 'scoped memory for concat_critic1_forward.1']
  %s0 = inlined_call_operand.vmem [shape: f32[8,1], index: 0, kind: input, shape index: {}]
  %s1 = inlined_call_operand.vmem [shape: f32[8,1], index: 1, kind: input, shape index: {}]
  %s2 = inlined_call_operand.vmem [shape: f32[2,128], index: 2, kind: input, shape index: {}]
  %s3 = inlined_call_operand.vmem [shape: f32[1,128], index: 3, kind: input, shape index: {}]
  %s4 = inlined_call_operand.vmem [shape: bf16[128,128], index: 4, kind: input, shape index: {}]
  %s5 = inlined_call_operand.vmem [shape: f32[1,128], index: 5, kind: input, shape index: {}]
  %s6 = inlined_call_operand.vmem [shape: bf16[128,128], index: 6, kind: input, shape index: {}]
  %s7 = inlined_call_operand.vmem [shape: f32[1,128], index: 7, kind: input, shape index: {}]
  %s8 = inlined_call_operand.vmem [shape: bf16[128,128], index: 8, kind: input, shape index: {}]
  %s9 = inlined_call_operand.vmem [shape: f32[1,128], index: 9, kind: input, shape index: {}]
  %s10 = inlined_call_operand.vmem [shape: f32[1,128], index: 10, kind: input, shape index: {}]
  %s11 = inlined_call_operand.<no memory space> [shape: f32[1,1], index: 11, kind: input, shape index: {}]
  %s12 = inlined_call_operand.hbm [shape: f32[8,8], index: 12, kind: output, shape index: {0}]
  %s13 = inlined_call_operand.hbm [shape: f32[8,8], index: 13, kind: output, shape index: {1}]
  %14 = xla_tuple %s12, %s13
  %s15 = sld [smem:[#allocation0]]
  $region66: #{concat_critic1_forward.1} parent=0
    _
  %s17 = ssub.s32 1, %s15
  %s18 = scalar_select 0, %s17, %s15
  %v19 = vstv %s11
  %20 = vst [vmem:[#allocation2] sm:$0x1] %v19
  $region1: #{concat_critic1_forward.1} parent=0
    #allocation3 [shape = 'u8[4096]{0}', space=vmem, size = 0x1000, scoped, tag = 'output window, operand 0, single buffered']
    #allocation4 [shape = 's32[1]{0}', space=sflag, size = 0x4, scoped, tag = 'scoped memory for concat_critic1_forward.1']
    #allocation5 [shape = 'u8[4096]{0}', space=vmem, size = 0x1000, scoped, tag = 'output window, operand 1, single buffered']
    #allocation6 [shape = 's32[1]{0}', space=sflag, size = 0x4, scoped, tag = 'scoped memory for concat_critic1_forward.1']
    %21 = vsyncpa [#allocation4], 0
    %22 = vsyncpa [#allocation6], 0
    // Predicated region
    $region2: #{concat_critic1_forward.1} parent=1 // pred_check
      _
    $region3: #{concat_critic1_forward.1} parent=1 // pred_check_branch
      %24 = sbr.rel (0) target = $region5
    $region4: #{concat_critic1_forward.1} parent=1 // pred_region
      _
    $region5: #{concat_critic1_forward.1} parent=1 // pred_fallthru
      _
    // Predicated region
    $region6: #{concat_critic1_forward.1} parent=1 // pred_check
      _
    $region7: #{concat_critic1_forward.1} parent=1 // pred_check_branch
      %26 = sbr.rel (0) target = $region9
    $region8: #{concat_critic1_forward.1} parent=1 // pred_region
      _
    $region9: #{concat_critic1_forward.1} parent=1 // pred_fallthru
      _
    // Predicated region
    $region10: #{concat_critic1_forward.1} parent=1 // pred_check
      _
    $region11: #{concat_critic1_forward.1} parent=1 // pred_check_branch
      %28 = sbr.rel (0) target = $region13
    $region12: #{concat_critic1_forward.1} parent=1 // pred_region
      _
    $region13: #{concat_critic1_forward.1} parent=1 // pred_fallthru
      _
    // Predicated region
    $region14: #{concat_critic1_forward.1} parent=1 // pred_check
      _
    $region15: #{concat_critic1_forward.1} parent=1 // pred_check_branch
      %30 = sbr.rel (0) target = $region17
    $region16: #{concat_critic1_forward.1} parent=1 // pred_region
      _
    $region17: #{concat_critic1_forward.1} parent=1 // pred_fallthru
      _
    // Predicated region
    $region18: #{concat_critic1_forward.1} parent=1 // pred_check
      _
    $region19: #{concat_critic1_forward.1} parent=1 // pred_check_branch
      %32 = sbr.rel (0) target = $region21
    $region20: #{concat_critic1_forward.1} parent=1 // pred_region
      _
    $region21: #{concat_critic1_forward.1} parent=1 // pred_fallthru
      _
    // Predicated region
    $region22: #{concat_critic1_forward.1} parent=1 // pred_check
      _
    $region23: #{concat_critic1_forward.1} parent=1 // pred_check_branch
      %34 = sbr.rel (0) target = $region25
    $region24: #{concat_critic1_forward.1} parent=1 // pred_region
      _
    $region25: #{concat_critic1_forward.1} parent=1 // pred_fallthru
      _
    // Predicated region
    $region26: #{concat_critic1_forward.1} parent=1 // pred_check
      _
    $region27: #{concat_critic1_forward.1} parent=1 // pred_check_branch
      %36 = sbr.rel (0) target = $region29
    $region28: #{concat_critic1_forward.1} parent=1 // pred_region
      _
    $region29: #{concat_critic1_forward.1} parent=1 // pred_fallthru
      _
    // Predicated region
    $region30: #{concat_critic1_forward.1} parent=1 // pred_check
      _
    $region31: #{concat_critic1_forward.1} parent=1 // pred_check_branch
      %38 = sbr.rel (0) target = $region33
    $region32: #{concat_critic1_forward.1} parent=1 // pred_region
      _
    $region33: #{concat_critic1_forward.1} parent=1 // pred_fallthru
      _
    // Predicated region
    $region34: #{concat_critic1_forward.1} parent=1 // pred_check
      _
    $region35: #{concat_critic1_forward.1} parent=1 // pred_check_branch
      %40 = sbr.rel (0) target = $region37
    $region36: #{concat_critic1_forward.1} parent=1 // pred_region
      _
    $region37: #{concat_critic1_forward.1} parent=1 // pred_fallthru
      _
    // Predicated region
    $region38: #{concat_critic1_forward.1} parent=1 // pred_check
      _
    $region39: #{concat_critic1_forward.1} parent=1 // pred_check_branch
      %42 = sbr.rel (0) target = $region41
    $region40: #{concat_critic1_forward.1} parent=1 // pred_region
      _
    $region41: #{concat_critic1_forward.1} parent=1 // pred_fallthru
      _
    // Predicated region
    $region42: #{concat_critic1_forward.1} parent=1 // pred_check
      _
    $region43: #{concat_critic1_forward.1} parent=1 // pred_check_branch
      %44 = sbr.rel (0) target = $region45
    $region44: #{concat_critic1_forward.1} parent=1 // pred_region
      _
    $region45: #{concat_critic1_forward.1} parent=1 // pred_fallthru
      _
    // Predicated region
    $region46: #{concat_critic1_forward.1} parent=1 // pred_check
      _
    $region47: #{concat_critic1_forward.1} parent=1 // pred_check_branch
      %46 = sbr.rel (0) target = $region49
    $region48: #{concat_critic1_forward.1} parent=1 // pred_region
      _
    $region49: #{concat_critic1_forward.1} parent=1 // pred_fallthru
      _
    %v47 = vld [vmem:[%s1] sm:$0xff]
    %v48 = vld [vmem:[%s2 + $0x1] sm:$0x1]
    %50 = vset.pattern.permute.xlu0 0
    %51 = vperm.xlu0 %50, %v47
    %v52 = vpop.permute.xlu0 %51
    %v54 = vperm.slane %v48, 0
    %v55 = vmul.f32 %v52, %v54
    %v56 = vld [vmem:[%s3] sm:$0x1]
    %v58 = vperm.slane %v56, 0
    %v60 = vadd.f32 %v55, %v58
    %v61 = vld [vmem:[%s2] sm:$0x1]
    %v62 = vld [vmem:[%s4] sm:$0xf]
    %v63 = vld [vmem:[%s4 + $0x4] sm:$0xf]
    %v64 = vld [vmem:[%s4 + $0x8] sm:$0xf]
    %v65 = vld [vmem:[%s4 + $0xc] sm:$0xf]
    %v66 = vld [vmem:[%s4 + $0x10] sm:$0xf]
    %v67 = vld [vmem:[%s4 + $0x14] sm:$0xf]
    %v68 = vld [vmem:[%s4 + $0x18] sm:$0xf]
    %v69 = vld [vmem:[%s4 + $0x1c] sm:$0xf]
    %v70 = vld [vmem:[%s4 + $0x20] sm:$0xf]
    %v71 = vld [vmem:[%s4 + $0x24] sm:$0xf]
    %v72 = vld [vmem:[%s4 + $0x28] sm:$0xf]
    %v73 = vld [vmem:[%s4 + $0x2c] sm:$0xf]
    %v74 = vld [vmem:[%s4 + $0x30] sm:$0xf]
    %v75 = vld [vmem:[%s4 + $0x34] sm:$0xf]
    %v76 = vld [vmem:[%s4 + $0x38] sm:$0xf]
    %v77 = vld [vmem:[%s4 + $0x3c] sm:$0xf]
    %v78 = vld [vmem:[%s5] sm:$0x1]
    %v79 = vld [vmem:[%s6] sm:$0xf]
    %v80 = vld [vmem:[%s6 + $0x4] sm:$0xf]
    %v81 = vld [vmem:[%s6 + $0x8] sm:$0xf]
    %v82 = vld [vmem:[%s6 + $0xc] sm:$0xf]
    %v83 = vld [vmem:[%s6 + $0x10] sm:$0xf]
    %v84 = vld [vmem:[%s6 + $0x14] sm:$0xf]
    %v85 = vld [vmem:[%s6 + $0x18] sm:$0xf]
    %v86 = vld [vmem:[%s6 + $0x1c] sm:$0xf]
    %v87 = vld [vmem:[%s6 + $0x20] sm:$0xf]
    %v88 = vld [vmem:[%s6 + $0x24] sm:$0xf]
    %v89 = vld [vmem:[%s6 + $0x28] sm:$0xf]
    %v90 = vld [vmem:[%s6 + $0x2c] sm:$0xf]
    %v91 = vld [vmem:[%s6 + $0x30] sm:$0xf]
    %v92 = vld [vmem:[%s6 + $0x34] sm:$0xf]
    %v93 = vld [vmem:[%s6 + $0x38] sm:$0xf]
    %v94 = vld [vmem:[%s6 + $0x3c] sm:$0xf]
    %v95 = vld [vmem:[%s7] sm:$0x1]
    %v96 = vld [vmem:[%s8] sm:$0xf]
    %v97 = vld [vmem:[%s8 + $0x4] sm:$0xf]
    %v98 = vld [vmem:[%s8 + $0x8] sm:$0xf]
    %v99 = vld [vmem:[%s8 + $0xc] sm:$0xf]
    %v100 = vld [vmem:[%s8 + $0x10] sm:$0xf]
    %v101 = vld [vmem:[%s8 + $0x14] sm:$0xf]
    %v102 = vld [vmem:[%s8 + $0x18] sm:$0xf]
    %v103 = vld [vmem:[%s8 + $0x1c] sm:$0xf]
    %v104 = vld [vmem:[%s8 + $0x20] sm:$0xf]
    %v105 = vld [vmem:[%s8 + $0x24] sm:$0xf]
    %v106 = vld [vmem:[%s8 + $0x28] sm:$0xf]
    %v107 = vld [vmem:[%s8 + $0x2c] sm:$0xf]
    %v108 = vld [vmem:[%s8 + $0x30] sm:$0xf]
    %v109 = vld [vmem:[%s8 + $0x34] sm:$0xf]
    %v110 = vld [vmem:[%s8 + $0x38] sm:$0xf]
    %v111 = vld [vmem:[%s8 + $0x3c] sm:$0xf]
    %v112 = vld [vmem:[%s9] sm:$0x1]
    %v113 = vld [vmem:[%s10] sm:$0x1]
    %v114 = vld [vmem:[#allocation2] sm:$0x1]
    %v115 = vld [vmem:[%s0] sm:$0x1]
    %117 = vset.pattern.permute.xlu0 0
    %118 = vperm.xlu0 %117, %v115
    %v119 = vpop.permute.xlu0 %118
    %v121 = vmul.f32 %v119, %v61
    %v122 = vperm.slane %v121, 0
    %v123 = vadd.f32 %v122, %v60
    %v124 = vmax.f32 %v123, 0.0
    %v125 = vpack.c.bf16 %v124, %v124
    %v127 = vperm.slane %v78, 0
    %v145 = vunpack.c.l.b16 %v62
    %v146 = vunpack.c.l.b16 %v63
    %v147 = vunpack.c.l.b16 %v64
    %v148 = vunpack.c.l.b16 %v65
    %v149 = vunpack.c.l.b16 %v66
    %v150 = vunpack.c.l.b16 %v67
    %v151 = vunpack.c.l.b16 %v68
    %v152 = vunpack.c.l.b16 %v69
    %v153 = vunpack.c.l.b16 %v70
    %v154 = vunpack.c.l.b16 %v71
    %v155 = vunpack.c.l.b16 %v72
    %v156 = vunpack.c.l.b16 %v73
    %v157 = vunpack.c.l.b16 %v74
    %v158 = vunpack.c.l.b16 %v75
    %v159 = vunpack.c.l.b16 %v76
    %v160 = vunpack.c.l.b16 %v77
    %v161 = vpack.c.b16 %v146, %v145
    %v162 = vpack.c.b16 %v148, %v147
    %v163 = vpack.c.b16 %v150, %v149
    %v164 = vpack.c.b16 %v152, %v151
    %v165 = vpack.c.b16 %v154, %v153
    %v166 = vpack.c.b16 %v156, %v155
    %v167 = vpack.c.b16 %v158, %v157
    %v168 = vpack.c.b16 %v160, %v159
    %177 = vmatpush.bf16.msra.mxu0 %v168
    %178 = vmatpush.bf16.msra.mxu0 %v167
    %179 = vmatpush.bf16.msra.mxu0 %v166
    %180 = vmatpush.bf16.msra.mxu0 %v165
    %181 = vmatpush.bf16.msra.mxu0 %v164
    %182 = vmatpush.bf16.msra.mxu0 %v163
    %183 = vmatpush.bf16.msra.mxu0 %v162
    %184 = vmatpush.bf16.msra.mxu0 %v161
    %185 = vmatmul.bf16.gmra.mxu0 %v125
    %v186 = vpop.f32.mrf.mxu0
    %v187 = vadd.f32 %v127, %v186
    %v188 = vpop.f32.mrf.mxu0
    %189 = vdwg.mxu0
    %v190 = vmax.f32 %v187, 0.0
    %v191 = vpack.c.bf16 %v190, %v190
    %v193 = vperm.slane %v95, 0
    %v211 = vunpack.c.l.b16 %v79
    %v212 = vunpack.c.l.b16 %v80
    %v213 = vunpack.c.l.b16 %v81
    %v214 = vunpack.c.l.b16 %v82
    %v215 = vunpack.c.l.b16 %v83
    %v216 = vunpack.c.l.b16 %v84
    %v217 = vunpack.c.l.b16 %v85
    %v218 = vunpack.c.l.b16 %v86
    %v219 = vunpack.c.l.b16 %v87
    %v220 = vunpack.c.l.b16 %v88
    %v221 = vunpack.c.l.b16 %v89
    %v222 = vunpack.c.l.b16 %v90
    %v223 = vunpack.c.l.b16 %v91
    %v224 = vunpack.c.l.b16 %v92
    %v225 = vunpack.c.l.b16 %v93
    %v226 = vunpack.c.l.b16 %v94
    %v227 = vpack.c.b16 %v212, %v211
    %v228 = vpack.c.b16 %v214, %v213
    %v229 = vpack.c.b16 %v216, %v215
    %v230 = vpack.c.b16 %v218, %v217
    %v231 = vpack.c.b16 %v220, %v219
    %v232 = vpack.c.b16 %v222, %v221
    %v233 = vpack.c.b16 %v224, %v223
    %v234 = vpack.c.b16 %v226, %v225
    %243 = vmatpush.bf16.msra.mxu0 %v234
    %244 = vmatpush.bf16.msra.mxu0 %v233
    %245 = vmatpush.bf16.msra.mxu0 %v232
    %246 = vmatpush.bf16.msra.mxu0 %v231
    %247 = vmatpush.bf16.msra.mxu0 %v230
    %248 = vmatpush.bf16.msra.mxu0 %v229
    %249 = vmatpush.bf16.msra.mxu0 %v228
    %250 = vmatpush.bf16.msra.mxu0 %v227
    %251 = vmatmul.bf16.gmra.mxu0 %v191
    %v252 = vpop.f32.mrf.mxu0
    %v253 = vadd.f32 %v193, %v252
    %v254 = vpop.f32.mrf.mxu0
    %255 = vdwg.mxu0
    %v256 = vmax.f32 %v253, 0.0
    %v257 = vpack.c.bf16 %v256, %v256
    %v259 = vperm.slane %v112, 0
    %v277 = vunpack.c.l.b16 %v96
    %v278 = vunpack.c.l.b16 %v97
    %v279 = vunpack.c.l.b16 %v98
    %v280 = vunpack.c.l.b16 %v99
    %v281 = vunpack.c.l.b16 %v100
    %v282 = vunpack.c.l.b16 %v101
    %v283 = vunpack.c.l.b16 %v102
    %v284 = vunpack.c.l.b16 %v103
    %v285 = vunpack.c.l.b16 %v104
    %v286 = vunpack.c.l.b16 %v105
    %v287 = vunpack.c.l.b16 %v106
    %v288 = vunpack.c.l.b16 %v107
    %v289 = vunpack.c.l.b16 %v108
    %v290 = vunpack.c.l.b16 %v109
    %v291 = vunpack.c.l.b16 %v110
    %v292 = vunpack.c.l.b16 %v111
    %v293 = vpack.c.b16 %v278, %v277
    %v294 = vpack.c.b16 %v280, %v279
    %v295 = vpack.c.b16 %v282, %v281
    %v296 = vpack.c.b16 %v284, %v283
    %v297 = vpack.c.b16 %v286, %v285
    %v298 = vpack.c.b16 %v288, %v287
    %v299 = vpack.c.b16 %v290, %v289
    %v300 = vpack.c.b16 %v292, %v291
    %309 = vmatpush.bf16.msra.mxu0 %v300
    %310 = vmatpush.bf16.msra.mxu0 %v299
    %311 = vmatpush.bf16.msra.mxu0 %v298
    %312 = vmatpush.bf16.msra.mxu0 %v297
    %313 = vmatpush.bf16.msra.mxu0 %v296
    %314 = vmatpush.bf16.msra.mxu0 %v295
    %315 = vmatpush.bf16.msra.mxu0 %v294
    %316 = vmatpush.bf16.msra.mxu0 %v293
    %317 = vmatmul.bf16.gmra.mxu0 %v257
    %v318 = vpop.f32.mrf.mxu0
    %v319 = vadd.f32 %v259, %v318
    %v320 = vpop.f32.mrf.mxu0
    %321 = vdwg.mxu0
    %v322 = vmax.f32 %v319, 0.0
    %324 = vset.pattern.permute.xlu0 0
    %325 = vperm.xlu0 %324, %v114
    %v326 = vpop.permute.xlu0 %325
    %v328 = vperm.slane %v326, 0
    %329 = vmatpush.xpose.msra.mxu0 0.0
    %330 = vmatpush.xpose.msra.mxu0 0.0
    %331 = vmatpush.xpose.msra.mxu0 0.0
    %332 = vmatpush.xpose.msra.mxu0 0.0
    %333 = vmatpush.xpose.msra.mxu0 0.0
    %334 = vmatpush.xpose.msra.mxu0 0.0
    %335 = vmatpush.xpose.msra.mxu0 0.0
    %336 = vmatpush.xpose.msra.mxu0 0.0
    %337 = vmatpush.xpose.msra.mxu0 0.0
    %338 = vmatpush.xpose.msra.mxu0 0.0
    %339 = vmatpush.xpose.msra.mxu0 0.0
    %340 = vmatpush.xpose.msra.mxu0 0.0
    %341 = vmatpush.xpose.msra.mxu0 0.0
    %342 = vmatpush.xpose.msra.mxu0 0.0
    %343 = vmatpush.xpose.msra.mxu0 0.0
    %344 = vmatpush.xpose.msra.mxu0 %v322
    %345 = vmatmul.f32.gmra.mxu0 %v113
    %v346 = vpop.f32.mrf.mxu0
    %v347 = vadd.f32 %v328, %v346
    %348 = vdwg.mxu0
    %vm349 = vcmask 57344
    %350 = vst.msk [vmem:[#allocation5] sm:$0x1] %vm349, %v347
    %v351 = vsub.f32 0.0, %v347
    %v352 = vmul.f32 %v351, 1.442695
    %v353 = vpow.pop %v352
    %v354 = vadd.f32 %v353, 1.0
    %v355 = vrcp.pop %v354
    %356 = vst.msk [vmem:[#allocation3] sm:$0x1] %vm349, %v355
    %v357 = vld [vmem:[%s0 + $0x1] sm:$0x1]
    %359 = vset.pattern.permute.xlu0 0
    %360 = vperm.xlu0 %359, %v357
    %v361 = vpop.permute.xlu0 %360
    %v363 = vmul.f32 %v361, %v61
    %v364 = vperm.slane %v363, 0
    %v365 = vadd.f32 %v364, %v60
    %v366 = vmax.f32 %v365, 0.0
    %v367 = vpack.c.bf16 %v366, %v366
    %368 = vmatpush.bf16.msra.mxu0 %v168
    %369 = vmatpush.bf16.msra.mxu0 %v167
    %370 = vmatpush.bf16.msra.mxu0 %v166
    %371 = vmatpush.bf16.msra.mxu0 %v165
    %372 = vmatpush.bf16.msra.mxu0 %v164
    %373 = vmatpush.bf16.msra.mxu0 %v163
    %374 = vmatpush.bf16.msra.mxu0 %v162
    %375 = vmatpush.bf16.msra.mxu0 %v161
    %376 = vmatmul.bf16.gmra.mxu0 %v367
    %v377 = vpop.f32.mrf.mxu0
    %v378 = vadd.f32 %v127, %v377
    %v379 = vpop.f32.mrf.mxu0
    %380 = vdwg.mxu0
    %v381 = vmax.f32 %v378, 0.0
    %v382 = vpack.c.bf16 %v381, %v381
    %383 = vmatpush.bf16.msra.mxu0 %v234
    %384 = vmatpush.bf16.msra.mxu0 %v233
    %385 = vmatpush.bf16.msra.mxu0 %v232
    %386 = vmatpush.bf16.msra.mxu0 %v231
    %387 = vmatpush.bf16.msra.mxu0 %v230
    %388 = vmatpush.bf16.msra.mxu0 %v229
    %389 = vmatpush.bf16.msra.mxu0 %v228
    %390 = vmatpush.bf16.msra.mxu0 %v227
    %391 = vmatmul.bf16.gmra.mxu0 %v382
    %v392 = vpop.f32.mrf.mxu0
    %v393 = vadd.f32 %v193, %v392
    %v394 = vpop.f32.mrf.mxu0
    %395 = vdwg.mxu0
    %v396 = vmax.f32 %v393, 0.0
    %v397 = vpack.c.bf16 %v396, %v396
    %398 = vmatpush.bf16.msra.mxu0 %v300
    %399 = vmatpush.bf16.msra.mxu0 %v299
    %400 = vmatpush.bf16.msra.mxu0 %v298
    %401 = vmatpush.bf16.msra.mxu0 %v297
    %402 = vmatpush.bf16.msra.mxu0 %v296
    %403 = vmatpush.bf16.msra.mxu0 %v295
    %404 = vmatpush.bf16.msra.mxu0 %v294
    %405 = vmatpush.bf16.msra.mxu0 %v293
    %406 = vmatmul.bf16.gmra.mxu0 %v397
    %v407 = vpop.f32.mrf.mxu0
    %v408 = vadd.f32 %v259, %v407
    %v409 = vpop.f32.mrf.mxu0
    %410 = vdwg.mxu0
    %v411 = vmax.f32 %v408, 0.0
    %412 = vmatpush.xpose.msra.mxu0 0.0
    %413 = vmatpush.xpose.msra.mxu0 0.0
    %414 = vmatpush.xpose.msra.mxu0 0.0
    %415 = vmatpush.xpose.msra.mxu0 0.0
    %416 = vmatpush.xpose.msra.mxu0 0.0
    %417 = vmatpush.xpose.msra.mxu0 0.0
    %418 = vmatpush.xpose.msra.mxu0 0.0
    %419 = vmatpush.xpose.msra.mxu0 0.0
    %420 = vmatpush.xpose.msra.mxu0 0.0
    %421 = vmatpush.xpose.msra.mxu0 0.0
    %422 = vmatpush.xpose.msra.mxu0 0.0
    %423 = vmatpush.xpose.msra.mxu0 0.0
    %424 = vmatpush.xpose.msra.mxu0 0.0
    %425 = vmatpush.xpose.msra.mxu0 0.0
    %426 = vmatpush.xpose.msra.mxu0 0.0
    %427 = vmatpush.xpose.msra.mxu0 %v411
    %428 = vmatmul.f32.gmra.mxu0 %v113
    %v429 = vpop.f32.mrf.mxu0
    %v430 = vadd.f32 %v328, %v429
    %431 = vdwg.mxu0
    %432 = vst.msk [vmem:[#allocation5 + $0x1] sm:$0x1] %vm349, %v430
    %v433 = vsub.f32 0.0, %v430
    %v434 = vmul.f32 %v433, 1.442695
    %v435 = vpow.pop %v434
    %v436 = vadd.f32 %v435, 1.0
    %v437 = vrcp.pop %v436
    %438 = vst.msk [vmem:[#allocation3 + $0x1] sm:$0x1] %vm349, %v437
    %v439 = vld [vmem:[%s0 + $0x2] sm:$0x1]
    %441 = vset.pattern.permute.xlu0 0
    %442 = vperm.xlu0 %441, %v439
    %v443 = vpop.permute.xlu0 %442
    %v445 = vmul.f32 %v443, %v61
    %v446 = vperm.slane %v445, 0
    %v447 = vadd.f32 %v446, %v60
    %v448 = vmax.f32 %v447, 0.0
    %v449 = vpack.c.bf16 %v448, %v448
    %450 = vmatpush.bf16.msra.mxu0 %v168
    %451 = vmatpush.bf16.msra.mxu0 %v167
    %452 = vmatpush.bf16.msra.mxu0 %v166
    %453 = vmatpush.bf16.msra.mxu0 %v165
    %454 = vmatpush.bf16.msra.mxu0 %v164
    %455 = vmatpush.bf16.msra.mxu0 %v163
    %456 = vmatpush.bf16.msra.mxu0 %v162
    %457 = vmatpush.bf16.msra.mxu0 %v161
    %458 = vmatmul.bf16.gmra.mxu0 %v449
    %v459 = vpop.f32.mrf.mxu0
    %v460 = vadd.f32 %v127, %v459
    %v461 = vpop.f32.mrf.mxu0
    %462 = vdwg.mxu0
    %v463 = vmax.f32 %v460, 0.0
    %v464 = vpack.c.bf16 %v463, %v463
    %465 = vmatpush.bf16.msra.mxu0 %v234
    %466 = vmatpush.bf16.msra.mxu0 %v233
    %467 = vmatpush.bf16.msra.mxu0 %v232
    %468 = vmatpush.bf16.msra.mxu0 %v231
    %469 = vmatpush.bf16.msra.mxu0 %v230
    %470 = vmatpush.bf16.msra.mxu0 %v229
    %471 = vmatpush.bf16.msra.mxu0 %v228
    %472 = vmatpush.bf16.msra.mxu0 %v227
    %473 = vmatmul.bf16.gmra.mxu0 %v464
    %v474 = vpop.f32.mrf.mxu0
    %v475 = vadd.f32 %v193, %v474
    %v476 = vpop.f32.mrf.mxu0
    %477 = vdwg.mxu0
    %v478 = vmax.f32 %v475, 0.0
    %v479 = vpack.c.bf16 %v478, %v478
    %480 = vmatpush.bf16.msra.mxu0 %v300
    %481 = vmatpush.bf16.msra.mxu0 %v299
    %482 = vmatpush.bf16.msra.mxu0 %v298
    %483 = vmatpush.bf16.msra.mxu0 %v297
    %484 = vmatpush.bf16.msra.mxu0 %v296
    %485 = vmatpush.bf16.msra.mxu0 %v295
    %486 = vmatpush.bf16.msra.mxu0 %v294
    %487 = vmatpush.bf16.msra.mxu0 %v293
    %488 = vmatmul.bf16.gmra.mxu0 %v479
    %v489 = vpop.f32.mrf.mxu0
    %v490 = vadd.f32 %v259, %v489
    %v491 = vpop.f32.mrf.mxu0
    %492 = vdwg.mxu0
    %v493 = vmax.f32 %v490, 0.0
    %494 = vmatpush.xpose.msra.mxu0 0.0
    %495 = vmatpush.xpose.msra.mxu0 0.0
    %496 = vmatpush.xpose.msra.mxu0 0.0
    %497 = vmatpush.xpose.msra.mxu0 0.0
    %498 = vmatpush.xpose.msra.mxu0 0.0
    %499 = vmatpush.xpose.msra.mxu0 0.0
    %500 = vmatpush.xpose.msra.mxu0 0.0
    %501 = vmatpush.xpose.msra.mxu0 0.0
    %502 = vmatpush.xpose.msra.mxu0 0.0
    %503 = vmatpush.xpose.msra.mxu0 0.0
    %504 = vmatpush.xpose.msra.mxu0 0.0
    %505 = vmatpush.xpose.msra.mxu0 0.0
    %506 = vmatpush.xpose.msra.mxu0 0.0
    %507 = vmatpush.xpose.msra.mxu0 0.0
    %508 = vmatpush.xpose.msra.mxu0 0.0
    %509 = vmatpush.xpose.msra.mxu0 %v493
    %510 = vmatmul.f32.gmra.mxu0 %v113
    %v511 = vpop.f32.mrf.mxu0
    %v512 = vadd.f32 %v328, %v511
    %513 = vdwg.mxu0
    %514 = vst.msk [vmem:[#allocation5 + $0x2] sm:$0x1] %vm349, %v512
    %v515 = vsub.f32 0.0, %v512
    %v516 = vmul.f32 %v515, 1.442695
    %v517 = vpow.pop %v516
    %v518 = vadd.f32 %v517, 1.0
    %v519 = vrcp.pop %v518
    %520 = vst.msk [vmem:[#allocation3 + $0x2] sm:$0x1] %vm349, %v519
    %v521 = vld [vmem:[%s0 + $0x3] sm:$0x1]
    %523 = vset.pattern.permute.xlu0 0
    %524 = vperm.xlu0 %523, %v521
    %v525 = vpop.permute.xlu0 %524
    %v527 = vmul.f32 %v525, %v61
    %v528 = vperm.slane %v527, 0
    %v529 = vadd.f32 %v528, %v60
    %v530 = vmax.f32 %v529, 0.0
    %v531 = vpack.c.bf16 %v530, %v530
    %532 = vmatpush.bf16.msra.mxu0 %v168
    %533 = vmatpush.bf16.msra.mxu0 %v167
    %534 = vmatpush.bf16.msra.mxu0 %v166
    %535 = vmatpush.bf16.msra.mxu0 %v165
    %536 = vmatpush.bf16.msra.mxu0 %v164
    %537 = vmatpush.bf16.msra.mxu0 %v163
    %538 = vmatpush.bf16.msra.mxu0 %v162
    %539 = vmatpush.bf16.msra.mxu0 %v161
    %540 = vmatmul.bf16.gmra.mxu0 %v531
    %v541 = vpop.f32.mrf.mxu0
    %v542 = vadd.f32 %v127, %v541
    %v543 = vpop.f32.mrf.mxu0
    %544 = vdwg.mxu0
    %v545 = vmax.f32 %v542, 0.0
    %v546 = vpack.c.bf16 %v545, %v545
    %547 = vmatpush.bf16.msra.mxu0 %v234
    %548 = vmatpush.bf16.msra.mxu0 %v233
    %549 = vmatpush.bf16.msra.mxu0 %v232
    %550 = vmatpush.bf16.msra.mxu0 %v231
    %551 = vmatpush.bf16.msra.mxu0 %v230
    %552 = vmatpush.bf16.msra.mxu0 %v229
    %553 = vmatpush.bf16.msra.mxu0 %v228
    %554 = vmatpush.bf16.msra.mxu0 %v227
    %555 = vmatmul.bf16.gmra.mxu0 %v546
    %v556 = vpop.f32.mrf.mxu0
    %v557 = vadd.f32 %v193, %v556
    %v558 = vpop.f32.mrf.mxu0
    %559 = vdwg.mxu0
    %v560 = vmax.f32 %v557, 0.0
    %v561 = vpack.c.bf16 %v560, %v560
    %562 = vmatpush.bf16.msra.mxu0 %v300
    %563 = vmatpush.bf16.msra.mxu0 %v299
    %564 = vmatpush.bf16.msra.mxu0 %v298
    %565 = vmatpush.bf16.msra.mxu0 %v297
    %566 = vmatpush.bf16.msra.mxu0 %v296
    %567 = vmatpush.bf16.msra.mxu0 %v295
    %568 = vmatpush.bf16.msra.mxu0 %v294
    %569 = vmatpush.bf16.msra.mxu0 %v293
    %570 = vmatmul.bf16.gmra.mxu0 %v561
    %v571 = vpop.f32.mrf.mxu0
    %v572 = vadd.f32 %v259, %v571
    %v573 = vpop.f32.mrf.mxu0
    %574 = vdwg.mxu0
    %v575 = vmax.f32 %v572, 0.0
    %576 = vmatpush.xpose.msra.mxu0 0.0
    %577 = vmatpush.xpose.msra.mxu0 0.0
    %578 = vmatpush.xpose.msra.mxu0 0.0
    %579 = vmatpush.xpose.msra.mxu0 0.0
    %580 = vmatpush.xpose.msra.mxu0 0.0
    %581 = vmatpush.xpose.msra.mxu0 0.0
    %582 = vmatpush.xpose.msra.mxu0 0.0
    %583 = vmatpush.xpose.msra.mxu0 0.0
    %584 = vmatpush.xpose.msra.mxu0 0.0
    %585 = vmatpush.xpose.msra.mxu0 0.0
    %586 = vmatpush.xpose.msra.mxu0 0.0
    %587 = vmatpush.xpose.msra.mxu0 0.0
    %588 = vmatpush.xpose.msra.mxu0 0.0
    %589 = vmatpush.xpose.msra.mxu0 0.0
    %590 = vmatpush.xpose.msra.mxu0 0.0
    %591 = vmatpush.xpose.msra.mxu0 %v575
    %592 = vmatmul.f32.gmra.mxu0 %v113
    %v593 = vpop.f32.mrf.mxu0
    %v594 = vadd.f32 %v328, %v593
    %595 = vdwg.mxu0
    %596 = vst.msk [vmem:[#allocation5 + $0x3] sm:$0x1] %vm349, %v594
    %v597 = vsub.f32 0.0, %v594
    %v598 = vmul.f32 %v597, 1.442695
    %v599 = vpow.pop %v598
    %v600 = vadd.f32 %v599, 1.0
    %v601 = vrcp.pop %v600
    %602 = vst.msk [vmem:[#allocation3 + $0x3] sm:$0x1] %vm349, %v601
    %v603 = vld [vmem:[%s0 + $0x4] sm:$0x1]
    %605 = vset.pattern.permute.xlu0 0
    %606 = vperm.xlu0 %605, %v603
    %v607 = vpop.permute.xlu0 %606
    %v609 = vmul.f32 %v607, %v61
    %v610 = vperm.slane %v609, 0
    %v611 = vadd.f32 %v610, %v60
    %v612 = vmax.f32 %v611, 0.0
    %v613 = vpack.c.bf16 %v612, %v612
    %614 = vmatpush.bf16.msra.mxu0 %v168
    %615 = vmatpush.bf16.msra.mxu0 %v167
    %616 = vmatpush.bf16.msra.mxu0 %v166
    %617 = vmatpush.bf16.msra.mxu0 %v165
    %618 = vmatpush.bf16.msra.mxu0 %v164
    %619 = vmatpush.bf16.msra.mxu0 %v163
    %620 = vmatpush.bf16.msra.mxu0 %v162
    %621 = vmatpush.bf16.msra.mxu0 %v161
    %622 = vmatmul.bf16.gmra.mxu0 %v613
    %v623 = vpop.f32.mrf.mxu0
    %v624 = vadd.f32 %v127, %v623
    %v625 = vpop.f32.mrf.mxu0
    %626 = vdwg.mxu0
    %v627 = vmax.f32 %v624, 0.0
    %v628 = vpack.c.bf16 %v627, %v627
    %629 = vmatpush.bf16.msra.mxu0 %v234
    %630 = vmatpush.bf16.msra.mxu0 %v233
    %631 = vmatpush.bf16.msra.mxu0 %v232
    %632 = vmatpush.bf16.msra.mxu0 %v231
    %633 = vmatpush.bf16.msra.mxu0 %v230
    %634 = vmatpush.bf16.msra.mxu0 %v229
    %635 = vmatpush.bf16.msra.mxu0 %v228
    %636 = vmatpush.bf16.msra.mxu0 %v227
    %637 = vmatmul.bf16.gmra.mxu0 %v628
    %v638 = vpop.f32.mrf.mxu0
    %v639 = vadd.f32 %v193, %v638
    %v640 = vpop.f32.mrf.mxu0
    %641 = vdwg.mxu0
    %v642 = vmax.f32 %v639, 0.0
    %v643 = vpack.c.bf16 %v642, %v642
    %644 = vmatpush.bf16.msra.mxu0 %v300
    %645 = vmatpush.bf16.msra.mxu0 %v299
    %646 = vmatpush.bf16.msra.mxu0 %v298
    %647 = vmatpush.bf16.msra.mxu0 %v297
    %648 = vmatpush.bf16.msra.mxu0 %v296
    %649 = vmatpush.bf16.msra.mxu0 %v295
    %650 = vmatpush.bf16.msra.mxu0 %v294
    %651 = vmatpush.bf16.msra.mxu0 %v293
    %652 = vmatmul.bf16.gmra.mxu0 %v643
    %v653 = vpop.f32.mrf.mxu0
    %v654 = vadd.f32 %v259, %v653
    %v655 = vpop.f32.mrf.mxu0
    %656 = vdwg.mxu0
    %v657 = vmax.f32 %v654, 0.0
    %658 = vmatpush.xpose.msra.mxu0 0.0
    %659 = vmatpush.xpose.msra.mxu0 0.0
    %660 = vmatpush.xpose.msra.mxu0 0.0
    %661 = vmatpush.xpose.msra.mxu0 0.0
    %662 = vmatpush.xpose.msra.mxu0 0.0
    %663 = vmatpush.xpose.msra.mxu0 0.0
    %664 = vmatpush.xpose.msra.mxu0 0.0
    %665 = vmatpush.xpose.msra.mxu0 0.0
    %666 = vmatpush.xpose.msra.mxu0 0.0
    %667 = vmatpush.xpose.msra.mxu0 0.0
    %668 = vmatpush.xpose.msra.mxu0 0.0
    %669 = vmatpush.xpose.msra.mxu0 0.0
    %670 = vmatpush.xpose.msra.mxu0 0.0
    %671 = vmatpush.xpose.msra.mxu0 0.0
    %672 = vmatpush.xpose.msra.mxu0 0.0
    %673 = vmatpush.xpose.msra.mxu0 %v657
    %674 = vmatmul.f32.gmra.mxu0 %v113
    %v675 = vpop.f32.mrf.mxu0
    %v676 = vadd.f32 %v328, %v675
    %677 = vdwg.mxu0
    %678 = vst.msk [vmem:[#allocation5 + $0x4] sm:$0x1] %vm349, %v676
    %v679 = vsub.f32 0.0, %v676
    %v680 = vmul.f32 %v679, 1.442695
    %v681 = vpow.pop %v680
    %v682 = vadd.f32 %v681, 1.0
    %v683 = vrcp.pop %v682
    %684 = vst.msk [vmem:[#allocation3 + $0x4] sm:$0x1] %vm349, %v683
    %v685 = vld [vmem:[%s0 + $0x5] sm:$0x1]
    %687 = vset.pattern.permute.xlu0 0
    %688 = vperm.xlu0 %687, %v685
    %v689 = vpop.permute.xlu0 %688
    %v691 = vmul.f32 %v689, %v61
    %v692 = vperm.slane %v691, 0
    %v693 = vadd.f32 %v692, %v60
    %v694 = vmax.f32 %v693, 0.0
    %v695 = vpack.c.bf16 %v694, %v694
    %696 = vmatpush.bf16.msra.mxu0 %v168
    %697 = vmatpush.bf16.msra.mxu0 %v167
    %698 = vmatpush.bf16.msra.mxu0 %v166
    %699 = vmatpush.bf16.msra.mxu0 %v165
    %700 = vmatpush.bf16.msra.mxu0 %v164
    %701 = vmatpush.bf16.msra.mxu0 %v163
    %702 = vmatpush.bf16.msra.mxu0 %v162
    %703 = vmatpush.bf16.msra.mxu0 %v161
    %704 = vmatmul.bf16.gmra.mxu0 %v695
    %v705 = vpop.f32.mrf.mxu0
    %v706 = vadd.f32 %v127, %v705
    %v707 = vpop.f32.mrf.mxu0
    %708 = vdwg.mxu0
    %v709 = vmax.f32 %v706, 0.0
    %v710 = vpack.c.bf16 %v709, %v709
    %711 = vmatpush.bf16.msra.mxu0 %v234
    %712 = vmatpush.bf16.msra.mxu0 %v233
    %713 = vmatpush.bf16.msra.mxu0 %v232
    %714 = vmatpush.bf16.msra.mxu0 %v231
    %715 = vmatpush.bf16.msra.mxu0 %v230
    %716 = vmatpush.bf16.msra.mxu0 %v229
    %717 = vmatpush.bf16.msra.mxu0 %v228
    %718 = vmatpush.bf16.msra.mxu0 %v227
    %719 = vmatmul.bf16.gmra.mxu0 %v710
    %v720 = vpop.f32.mrf.mxu0
    %v721 = vadd.f32 %v193, %v720
    %v722 = vpop.f32.mrf.mxu0
    %723 = vdwg.mxu0
    %v724 = vmax.f32 %v721, 0.0
    %v725 = vpack.c.bf16 %v724, %v724
    %726 = vmatpush.bf16.msra.mxu0 %v300
    %727 = vmatpush.bf16.msra.mxu0 %v299
    %728 = vmatpush.bf16.msra.mxu0 %v298
    %729 = vmatpush.bf16.msra.mxu0 %v297
    %730 = vmatpush.bf16.msra.mxu0 %v296
    %731 = vmatpush.bf16.msra.mxu0 %v295
    %732 = vmatpush.bf16.msra.mxu0 %v294
    %733 = vmatpush.bf16.msra.mxu0 %v293
    %734 = vmatmul.bf16.gmra.mxu0 %v725
    %v735 = vpop.f32.mrf.mxu0
    %v736 = vadd.f32 %v259, %v735
    %v737 = vpop.f32.mrf.mxu0
    %738 = vdwg.mxu0
    %v739 = vmax.f32 %v736, 0.0
    %740 = vmatpush.xpose.msra.mxu0 0.0
    %741 = vmatpush.xpose.msra.mxu0 0.0
    %742 = vmatpush.xpose.msra.mxu0 0.0
    %743 = vmatpush.xpose.msra.mxu0 0.0
    %744 = vmatpush.xpose.msra.mxu0 0.0
    %745 = vmatpush.xpose.msra.mxu0 0.0
    %746 = vmatpush.xpose.msra.mxu0 0.0
    %747 = vmatpush.xpose.msra.mxu0 0.0
    %748 = vmatpush.xpose.msra.mxu0 0.0
    %749 = vmatpush.xpose.msra.mxu0 0.0
    %750 = vmatpush.xpose.msra.mxu0 0.0
    %751 = vmatpush.xpose.msra.mxu0 0.0
    %752 = vmatpush.xpose.msra.mxu0 0.0
    %753 = vmatpush.xpose.msra.mxu0 0.0
    %754 = vmatpush.xpose.msra.mxu0 0.0
    %755 = vmatpush.xpose.msra.mxu0 %v739
    %756 = vmatmul.f32.gmra.mxu0 %v113
    %v757 = vpop.f32.mrf.mxu0
    %v758 = vadd.f32 %v328, %v757
    %759 = vdwg.mxu0
    %760 = vst.msk [vmem:[#allocation5 + $0x5] sm:$0x1] %vm349, %v758
    %v761 = vsub.f32 0.0, %v758
    %v762 = vmul.f32 %v761, 1.442695
    %v763 = vpow.pop %v762
    %v764 = vadd.f32 %v763, 1.0
    %v765 = vrcp.pop %v764
    %766 = vst.msk [vmem:[#allocation3 + $0x5] sm:$0x1] %vm349, %v765
    %v767 = vld [vmem:[%s0 + $0x6] sm:$0x1]
    %769 = vset.pattern.permute.xlu0 0
    %770 = vperm.xlu0 %769, %v767
    %v771 = vpop.permute.xlu0 %770
    %v773 = vmul.f32 %v771, %v61
    %v774 = vperm.slane %v773, 0
    %v775 = vadd.f32 %v774, %v60
    %v776 = vmax.f32 %v775, 0.0
    %v777 = vpack.c.bf16 %v776, %v776
    %778 = vmatpush.bf16.msra.mxu0 %v168
    %779 = vmatpush.bf16.msra.mxu0 %v167
    %780 = vmatpush.bf16.msra.mxu0 %v166
    %781 = vmatpush.bf16.msra.mxu0 %v165
    %782 = vmatpush.bf16.msra.mxu0 %v164
    %783 = vmatpush.bf16.msra.mxu0 %v163
    %784 = vmatpush.bf16.msra.mxu0 %v162
    %785 = vmatpush.bf16.msra.mxu0 %v161
    %786 = vmatmul.bf16.gmra.mxu0 %v777
    %v787 = vpop.f32.mrf.mxu0
    %v788 = vadd.f32 %v127, %v787
    %v789 = vpop.f32.mrf.mxu0
    %790 = vdwg.mxu0
    %v791 = vmax.f32 %v788, 0.0
    %v792 = vpack.c.bf16 %v791, %v791
    %793 = vmatpush.bf16.msra.mxu0 %v234
    %794 = vmatpush.bf16.msra.mxu0 %v233
    %795 = vmatpush.bf16.msra.mxu0 %v232
    %796 = vmatpush.bf16.msra.mxu0 %v231
    %797 = vmatpush.bf16.msra.mxu0 %v230
    %798 = vmatpush.bf16.msra.mxu0 %v229
    %799 = vmatpush.bf16.msra.mxu0 %v228
    %800 = vmatpush.bf16.msra.mxu0 %v227
    %801 = vmatmul.bf16.gmra.mxu0 %v792
    %v802 = vpop.f32.mrf.mxu0
    %v803 = vadd.f32 %v193, %v802
    %v804 = vpop.f32.mrf.mxu0
    %805 = vdwg.mxu0
    %v806 = vmax.f32 %v803, 0.0
    %v807 = vpack.c.bf16 %v806, %v806
    %808 = vmatpush.bf16.msra.mxu0 %v300
    %809 = vmatpush.bf16.msra.mxu0 %v299
    %810 = vmatpush.bf16.msra.mxu0 %v298
    %811 = vmatpush.bf16.msra.mxu0 %v297
    %812 = vmatpush.bf16.msra.mxu0 %v296
    %813 = vmatpush.bf16.msra.mxu0 %v295
    %814 = vmatpush.bf16.msra.mxu0 %v294
    %815 = vmatpush.bf16.msra.mxu0 %v293
    %816 = vmatmul.bf16.gmra.mxu0 %v807
    %v817 = vpop.f32.mrf.mxu0
    %v818 = vadd.f32 %v259, %v817
    %v819 = vpop.f32.mrf.mxu0
    %820 = vdwg.mxu0
    %v821 = vmax.f32 %v818, 0.0
    %822 = vmatpush.xpose.msra.mxu0 0.0
    %823 = vmatpush.xpose.msra.mxu0 0.0
    %824 = vmatpush.xpose.msra.mxu0 0.0
    %825 = vmatpush.xpose.msra.mxu0 0.0
    %826 = vmatpush.xpose.msra.mxu0 0.0
    %827 = vmatpush.xpose.msra.mxu0 0.0
    %828 = vmatpush.xpose.msra.mxu0 0.0
    %829 = vmatpush.xpose.msra.mxu0 0.0
    %830 = vmatpush.xpose.msra.mxu0 0.0
    %831 = vmatpush.xpose.msra.mxu0 0.0
    %832 = vmatpush.xpose.msra.mxu0 0.0
    %833 = vmatpush.xpose.msra.mxu0 0.0
    %834 = vmatpush.xpose.msra.mxu0 0.0
    %835 = vmatpush.xpose.msra.mxu0 0.0
    %836 = vmatpush.xpose.msra.mxu0 0.0
    %837 = vmatpush.xpose.msra.mxu0 %v821
    %838 = vmatmul.f32.gmra.mxu0 %v113
    %v839 = vpop.f32.mrf.mxu0
    %v840 = vadd.f32 %v328, %v839
    %841 = vdwg.mxu0
    %842 = vst.msk [vmem:[#allocation5 + $0x6] sm:$0x1] %vm349, %v840
    %v843 = vsub.f32 0.0, %v840
    %v844 = vmul.f32 %v843, 1.442695
    %v845 = vpow.pop %v844
    %v846 = vadd.f32 %v845, 1.0
    %v847 = vrcp.pop %v846
    %848 = vst.msk [vmem:[#allocation3 + $0x6] sm:$0x1] %vm349, %v847
    %v849 = vld [vmem:[%s0 + $0x7] sm:$0x1]
    %851 = vset.pattern.permute.xlu0 0
    %852 = vperm.xlu0 %851, %v849
    %v853 = vpop.permute.xlu0 %852
    %v855 = vmul.f32 %v853, %v61
    %v856 = vperm.slane %v855, 0
    %v857 = vadd.f32 %v856, %v60
    %v858 = vmax.f32 %v857, 0.0
    %v859 = vpack.c.bf16 %v858, %v858
    %860 = vmatpush.bf16.msra.mxu0 %v168
    %861 = vmatpush.bf16.msra.mxu0 %v167
    %862 = vmatpush.bf16.msra.mxu0 %v166
    %863 = vmatpush.bf16.msra.mxu0 %v165
    %864 = vmatpush.bf16.msra.mxu0 %v164
    %865 = vmatpush.bf16.msra.mxu0 %v163
    %866 = vmatpush.bf16.msra.mxu0 %v162
    %867 = vmatpush.bf16.msra.mxu0 %v161
    %868 = vmatmul.bf16.gmra.mxu0 %v859
    %v869 = vpop.f32.mrf.mxu0
    %v870 = vadd.f32 %v127, %v869
    %v871 = vpop.f32.mrf.mxu0
    %872 = vdwg.mxu0
    %v873 = vmax.f32 %v870, 0.0
    %v874 = vpack.c.bf16 %v873, %v873
    %875 = vmatpush.bf16.msra.mxu0 %v234
    %876 = vmatpush.bf16.msra.mxu0 %v233
    %877 = vmatpush.bf16.msra.mxu0 %v232
    %878 = vmatpush.bf16.msra.mxu0 %v231
    %879 = vmatpush.bf16.msra.mxu0 %v230
    %880 = vmatpush.bf16.msra.mxu0 %v229
    %881 = vmatpush.bf16.msra.mxu0 %v228
    %882 = vmatpush.bf16.msra.mxu0 %v227
    %883 = vmatmul.bf16.gmra.mxu0 %v874
    %v884 = vpop.f32.mrf.mxu0
    %v885 = vadd.f32 %v193, %v884
    %v886 = vpop.f32.mrf.mxu0
    %887 = vdwg.mxu0
    %v888 = vmax.f32 %v885, 0.0
    %v889 = vpack.c.bf16 %v888, %v888
    %890 = vmatpush.bf16.msra.mxu0 %v300
    %891 = vmatpush.bf16.msra.mxu0 %v299
    %892 = vmatpush.bf16.msra.mxu0 %v298
    %893 = vmatpush.bf16.msra.mxu0 %v297
    %894 = vmatpush.bf16.msra.mxu0 %v296
    %895 = vmatpush.bf16.msra.mxu0 %v295
    %896 = vmatpush.bf16.msra.mxu0 %v294
    %897 = vmatpush.bf16.msra.mxu0 %v293
    %898 = vmatmul.bf16.gmra.mxu0 %v889
    %v899 = vpop.f32.mrf.mxu0
    %v900 = vadd.f32 %v259, %v899
    %v901 = vpop.f32.mrf.mxu0
    %902 = vdwg.mxu0
    %v903 = vmax.f32 %v900, 0.0
    %904 = vmatpush.xpose.msra.mxu0 0.0
    %905 = vmatpush.xpose.msra.mxu0 0.0
    %906 = vmatpush.xpose.msra.mxu0 0.0
    %907 = vmatpush.xpose.msra.mxu0 0.0
    %908 = vmatpush.xpose.msra.mxu0 0.0
    %909 = vmatpush.xpose.msra.mxu0 0.0
    %910 = vmatpush.xpose.msra.mxu0 0.0
    %911 = vmatpush.xpose.msra.mxu0 0.0
    %912 = vmatpush.xpose.msra.mxu0 0.0
    %913 = vmatpush.xpose.msra.mxu0 0.0
    %914 = vmatpush.xpose.msra.mxu0 0.0
    %915 = vmatpush.xpose.msra.mxu0 0.0
    %916 = vmatpush.xpose.msra.mxu0 0.0
    %917 = vmatpush.xpose.msra.mxu0 0.0
    %918 = vmatpush.xpose.msra.mxu0 0.0
    %919 = vmatpush.xpose.msra.mxu0 %v903
    %920 = vmatmul.f32.gmra.mxu0 %v113
    %v921 = vpop.f32.mrf.mxu0
    %v922 = vadd.f32 %v328, %v921
    %923 = vdwg.mxu0
    %924 = vst.msk [vmem:[#allocation5 + $0x7] sm:$0x1] %vm349, %v922
    %v925 = vsub.f32 0.0, %v922
    %v926 = vmul.f32 %v925, 1.442695
    %v927 = vpow.pop %v926
    %v928 = vadd.f32 %v927, 1.0
    %v929 = vrcp.pop %v928
    %930 = vst.msk [vmem:[#allocation3 + $0x7] sm:$0x1] %vm349, %v929
    // Predicated region
    $region50: #{concat_critic1_forward.1} parent=1 // pred_check
      _
    $region51: #{concat_critic1_forward.1} parent=1 // pred_check_branch
      %932 = sbr.rel (0) target = $region53
    $region52: #{concat_critic1_forward.1} parent=1 // pred_region
      %934 = vsyncadd [#allocation4], 0
      %s936 = sshll.u32 [#allocation3], 4
      %s937 = int_to_ptr.vmem [resolvable:$true] %s936
      %s938 = sshll.u32 %s12, 4
      %s939 = int_to_ptr.hbm [resolvable:$true] %s938
      %941 = dma.vmem_to_hbm [thread:$0]  %s937, 128, %s939, [#allocation4]
    $region53: #{concat_critic1_forward.1} parent=1 // pred_fallthru
      _
    // Predicated region
    $region54: #{concat_critic1_forward.1} parent=1 // pred_check
      _
    $region55: #{concat_critic1_forward.1} parent=1 // pred_check_branch
      %943 = sbr.rel (0) target = $region57
    $region56: #{concat_critic1_forward.1} parent=1 // pred_region
      %945 = vsyncadd [#allocation6], 0
      %s947 = sshll.u32 [#allocation5], 4
      %s948 = int_to_ptr.vmem [resolvable:$true] %s947
      %s949 = sshll.u32 %s13, 4
      %s950 = int_to_ptr.hbm [resolvable:$true] %s949
      %952 = dma.vmem_to_hbm [thread:$0]  %s948, 128, %s950, [#allocation6]
    $region57: #{concat_critic1_forward.1} parent=1 // pred_fallthru
      _
    // Predicated region
    $region58: #{concat_critic1_forward.1} parent=1 // pred_check
      _
    $region59: #{concat_critic1_forward.1} parent=1 // pred_check_branch
      %954 = sbr.rel (0) target = $region61
    $region60: #{concat_critic1_forward.1} parent=1 // pred_region
      %956 = dma.done [#allocation4], 128
    $region61: #{concat_critic1_forward.1} parent=1 // pred_fallthru
      _
    // Predicated region
    $region62: #{concat_critic1_forward.1} parent=1 // pred_check
      _
    $region63: #{concat_critic1_forward.1} parent=1 // pred_check_branch
      %958 = sbr.rel (0) target = $region65
    $region64: #{concat_critic1_forward.1} parent=1 // pred_region
      %960 = dma.done [#allocation6], 128
    $region65: #{concat_critic1_forward.1} parent=1 // pred_fallthru
      _
    %961 = vsyncpa [#allocation4], 1
    %962 = vsyncpa [#allocation6], 1

</llo_original>
